<compile_context>
chip_gen: v7x
topology: tpu7x:2x2x1
jax: 0.10.0
libtpu: 0.0.40
codegen_flags: <defaults>
</compile_context>

<pallas_src>
import functools
import math

import jax
import jax.numpy as jnp
from jax.experimental import pallas as pl
from jax.experimental.pallas import tpu as pltpu

# ----------------------- architecture (small, synthetic) -----------------------
NB         = 4     # independent batches per pallas_call (grid axis, "parallel")
BATCH      = 128   # per-batch rows (full batch per grid step -> BN stats correct)
NUM_INPUT  = 128   # vocab size
EN1_UNITS  = 64
EN2_UNITS  = 64
NUM_TOPIC  = 16
H_DIM      = 32
VARIANCE   = 0.995  # prior variance
BN_EPS     = 1e-5

assert EN1_UNITS == EN2_UNITS  # needed for packing b1|b2 into one array


def _supports_bf16_eup():
    """bf16 transcendentals pay off on v6e/v7x (bf16 EUP/VPU); not on <= v5e."""
    try:
        kind = jax.devices()[0].device_kind.lower()
    except Exception:
        return False
    if "tpu" not in kind:
        return True  # interpret / emulation: bf16 math is harmless
    return not any(tag in kind for tag in ("v2", "v3", "v4", "v5"))


# --------------------------------- kernel --------------------------------------
def ntm_kernel(inv_prior_var, prior_logvar, num_topic, inv_batch, bf16_eup,
               x_ref, eps_ref,
               w1_ref, w2_ref, wmlv_ref, wt_ref, ww_ref,
               encb_ref, mlvp_ref, decp_ref,
               recon_ref, dt_ref, loss_ref):
    f32 = jnp.float32
    bf16 = jnp.bfloat16
    eup_dt = bf16 if bf16_eup else f32   # dtype for the big transcendental passes

    x = x_ref[...]        # (B, V) f32 — kept f32: needed exactly for the NL loss
    eps = eps_ref[...]    # (B, T) f32
    encb = encb_ref[...]  # (2, EN1):  [b1; b2]
    mlvp = mlvp_ref[...]  # (3, 2T):   [bm|blv; gm|glv; betam|betalv]
    decp = decp_ref[...]  # (3, V):    [bw; gd; betad]

    T = eps.shape[1]

    def dot(a, w_ref):
        # bf16 MXU matmul, f32 accumulation.
        return jnp.dot(a.astype(bf16), w_ref[...], preferred_element_type=f32)

    def softplus(v):
        # numerically stable softplus; big EUP pass -> bf16 on v6e/v7x
        v = v.astype(eup_dt)
        return jnp.maximum(v, 0) + jnp.log(1 + jnp.exp(-jnp.abs(v)))

    def batchnorm_train(v, gamma, beta):
        # training-mode BN: full-batch biased statistics, f32 for accuracy.
        mu = jnp.mean(v, axis=0, keepdims=True)
        d = v - mu
        var = jnp.mean(d * d, axis=0, keepdims=True)
        return d * jax.lax.rsqrt(var + BN_EPS) * gamma + beta

    # ---- encoder ----
    en1 = softplus(dot(x, w1_ref) + encb[0:1, :])      # stays bf16 -> next matmul
    en2 = softplus(dot(en1, w2_ref) + encb[1:2, :])    # en2_drop: identity (eval)

    # ---- fused mean|logvar head: one matmul + one BN, then slice ----
    mlv = batchnorm_train(dot(en2, wmlv_ref) + mlvp[0:1, :],
                          mlvp[1:2, :], mlvp[2:3, :])
    posterior_mean = mlv[:, :T]
    posterior_logvar = mlv[:, T:]
    std = jnp.exp(0.5 * posterior_logvar)      # f32 (small, KLD-sensitive)
    posterior_var = std * std                  # reuses std: one EUP exp saved

    # ---- reparameterization + softmax over topics (small (B,T), f32) ----
    z = posterior_mean + std * eps
    zm = jnp.max(z, axis=1, keepdims=True)
    ze = jnp.exp(z - zm)
    p = ze / jnp.sum(ze, axis=1, keepdims=True)        # p_drop: identity (eval)

    # ---- decoder ----
    dt_vec = jnp.tanh(dot(p, wt_ref).astype(eup_dt))
    logits = batchnorm_train(dot(dt_vec, ww_ref) + decp[0:1, :],
                             decp[1:2, :], decp[2:3, :])
    lm = jnp.max(logits, axis=1, keepdims=True)
    le = jnp.exp((logits - lm).astype(eup_dt)).astype(f32)
    denom = jnp.sum(le, axis=1, keepdims=True)
    recon = le / denom                    # exact normalization: rows sum to 1

    recon_ref[...] = recon
    dt_ref[...] = dt_vec.astype(f32)

    # ---- loss (compute_loss=True, avg_loss=True) ----
    # NL from pre-softmax logits (log-softmax form): one (B,1) log instead of a
    # full (B,V) log(recon + 1e-10) pass.
    log_recon = (logits - lm) - jnp.log(denom)
    NL = -jnp.sum(x * log_recon, axis=1, keepdims=True)                      # (B,1)
    var_division = posterior_var * inv_prior_var
    diff_term = posterior_mean * posterior_mean * inv_prior_var
    logvar_division = prior_logvar - posterior_logvar
    KLD = 0.5 * (jnp.sum(var_division + diff_term + logvar_division,
                         axis=1, keepdims=True) - num_topic)                 # (B,1)
    loss_ref[...] = jnp.sum(NL + KLD, axis=0, keepdims=True) * inv_batch     # (1,1)


# --------------------------------- wrapper --------------------------------------
def _resident(shape):
    # Constant index_map: same block every grid step -> weight stays in VMEM,
    # no re-DMA across the batch grid axis.
    return pl.BlockSpec(shape, lambda i: (0,) * len(shape))


def ntm_forward(params, x, eps, *, batch_size=BATCH, bf16_eup=None):
    total, V = x.shape
    assert total % batch_size == 0
    nb = total // batch_size
    B = batch_size
    T = params["wm"].shape[1]
    H = params["wt"].shape[1]

    if bf16_eup is None:
        bf16_eup = _supports_bf16_eup()

    bf16 = jnp.bfloat16
    # Fuse the mean/logvar heads (BN stats are per-column -> bit-identical).
    wmlv = jnp.concatenate([params["wm"], params["wlv"]], axis=1).astype(bf16)
    w1 = params["w1"].astype(bf16)
    w2 = params["w2"].astype(bf16)
    wt = params["wt"].astype(bf16)
    ww = params["ww"].astype(bf16)
    # Pack small (1, N) vectors grouped by width to cut DMA / argument count.
    enc_b = jnp.concatenate([params["b1"], params["b2"]], axis=0)          # (2, EN1)
    mlv_p = jnp.concatenate([
        jnp.concatenate([params["bm"], params["blv"]], axis=1),
        jnp.concatenate([params["gm"], params["glv"]], axis=1),
        jnp.concatenate([params["betam"], params["betalv"]], axis=1),
    ], axis=0)                                                             # (3, 2T)
    dec_p = jnp.concatenate([params["bw"], params["gd"], params["betad"]],
                            axis=0)                                        # (3, V)

    inputs = (x, eps, w1, w2, wmlv, wt, ww, enc_b, mlv_p, dec_p)

    # Python floats / bool -> baked compile-time constants (nothing captured).
    kernel = functools.partial(
        ntm_kernel,
        1.0 / VARIANCE,          # 1 / prior_var
        math.log(VARIANCE),      # prior_logvar
        float(T),                # num_topic
        1.0 / float(B),          # 1 / batch (for avg loss)
        bool(bf16_eup),
    )

    # Advisory cost estimate so XLA can overlap this tiny call with neighbours.
    mm_elems = (w1.shape[0] * w1.shape[1] + w2.shape[0] * w2.shape[1]
                + wmlv.shape[0] * wmlv.shape[1] + wt.shape[0] * wt.shape[1]
                + ww.shape[0] * ww.shape[1])
    flops = 2 * nb * B * mm_elems
    transcendentals = nb * B * (2 * w1.shape[1] * 2 + 2 * w2.shape[1] * 2
                                + 3 * T + H + V)
    bytes_accessed = (sum(int(a.size) * a.dtype.itemsize for a in inputs)
                      + (nb * B * V + nb * B * H + nb) * 4)
    cost = pl.CostEstimate(flops=int(flops),
                           transcendentals=int(transcendentals),
                           bytes_accessed=int(bytes_accessed))

    recon, dt_vec, loss = pl.pallas_call(
        kernel,
        out_shape=(
            jax.ShapeDtypeStruct((nb * B, V), jnp.float32),
            jax.ShapeDtypeStruct((nb * B, H), jnp.float32),
            jax.ShapeDtypeStruct((nb, 1, 1), jnp.float32),
        ),
        grid=(nb,),
        in_specs=[
            pl.BlockSpec((B, V), lambda i: (i, 0)),   # x: one batch per step
            pl.BlockSpec((B, T), lambda i: (i, 0)),   # eps
            _resident(w1.shape), _resident(w2.shape), _resident(wmlv.shape),
            _resident(wt.shape), _resident(ww.shape),
            _resident(enc_b.shape), _resident(mlv_p.shape), _resident(dec_p.shape),
        ],
        out_specs=(
            pl.BlockSpec((B, V), lambda i: (i, 0)),
            pl.BlockSpec((B, H), lambda i: (i, 0)),
            pl.BlockSpec((None, 1, 1), lambda i: (i, 0, 0)),  # per-batch avg loss
        ),
        compiler_params=pltpu.CompilerParams(
            # Each grid step is an independent batch (full-batch BN inside the
            # step), so the axis is embarrassingly parallel -> megacore on v7x.
            dimension_semantics=("parallel",),
        ),
        cost_estimate=cost,
    )(*inputs)
    return recon, loss[:, 0, 0], dt_vec


# ----------------------- pure-JAX reference (for checking) -----------------------
def ntm_reference(params, x, eps):
    def bn(v, g, b):
        mu = v.mean(0, keepdims=True)
        var = ((v - mu) ** 2).mean(0, keepdims=True)
        return (v - mu) / jnp.sqrt(var + BN_EPS) * g + b

    en1 = jax.nn.softplus(x @ params["w1"] + params["b1"])
    en2 = jax.nn.softplus(en1 @ params["w2"] + params["b2"])
    pm = bn(en2 @ params["wm"] + params["bm"], params["gm"], params["betam"])
    plv = bn(en2 @ params["wlv"] + params["blv"], params["glv"], params["betalv"])
    pv = jnp.exp(plv)
    z = pm + jnp.sqrt(pv) * eps
    p = jax.nn.softmax(z, axis=1)
    dt = jnp.tanh(p @ params["wt"])
    recon = jax.nn.softmax(
        bn(dt @ params["ww"] + params["bw"], params["gd"], params["betad"]), axis=1)
    NL = -(x * jnp.log(recon + 1e-10)).sum(1)
    var_div = pv / VARIANCE
    diff_term = pm * pm / VARIANCE
    logvar_div = math.log(VARIANCE) - plv
    KLD = 0.5 * ((var_div + diff_term + logvar_div).sum(1) - NUM_TOPIC)
    return recon, (NL + KLD).mean(), dt


# ---------------------------- parameter init -------------------------------------
def xavier_normal(key, fan_in, fan_out):
    std = (2.0 / (fan_in + fan_out)) ** 0.5
    # stored pre-transposed as (in, out)
    return std * jax.random.normal(key, (fan_in, fan_out), dtype=jnp.float32)


def init_params(key):
    ks = jax.random.split(key, 6)
    p = {}
    p["w1"] = xavier_normal(ks[0], NUM_INPUT, EN1_UNITS)
    p["b1"] = jnp.zeros((1, EN1_UNITS), jnp.float32)
    p["w2"] = xavier_normal(ks[1], EN1_UNITS, EN2_UNITS)
    p["b2"] = jnp.zeros((1, EN2_UNITS), jnp.float32)
    p["wm"] = xavier_normal(ks[2], EN2_UNITS, NUM_TOPIC)
    p["bm"] = jnp.zeros((1, NUM_TOPIC), jnp.float32)
    p["gm"] = jnp.ones((1, NUM_TOPIC), jnp.float32)      # mean_bn gamma
    p["betam"] = jnp.zeros((1, NUM_TOPIC), jnp.float32)  # mean_bn beta
    p["wlv"] = xavier_normal(ks[3], EN2_UNITS, NUM_TOPIC)
    p["blv"] = jnp.zeros((1, NUM_TOPIC), jnp.float32)
    p["glv"] = jnp.ones((1, NUM_TOPIC), jnp.float32)
    p["betalv"] = jnp.zeros((1, NUM_TOPIC), jnp.float32)
    p["wt"] = xavier_normal(ks[4], NUM_TOPIC, H_DIM)     # topic_emb (no bias)
    p["ww"] = xavier_normal(ks[5], H_DIM, NUM_INPUT)     # word_emb
    p["bw"] = jnp.zeros((1, NUM_INPUT), jnp.float32)
    p["gd"] = jnp.ones((1, NUM_INPUT), jnp.float32)      # decoder_bn gamma
    p["betad"] = jnp.zeros((1, NUM_INPUT), jnp.float32)
    return p


if __name__ == "__main__":
    key = jax.random.PRNGKey(0)
    k_param, k_x, k_eps = jax.random.split(key, 3)

    params = init_params(k_param)
    # NB independent batches stacked along rows; bag-of-words style input.
    x = jax.random.uniform(k_x, (NB * BATCH, NUM_INPUT), dtype=jnp.float32) * 3.0
    eps = jax.random.normal(k_eps, (NB * BATCH, NUM_TOPIC), dtype=jnp.float32)

    fwd = jax.jit(functools.partial(ntm_forward, batch_size=BATCH))
    recon, loss, dt_vec = fwd(params, x, eps)
    jax.block_until_ready((recon, loss, dt_vec))

    assert recon.shape == (NB * BATCH, NUM_INPUT)
    assert dt_vec.shape == (NB * BATCH, H_DIM)
    assert loss.shape == (NB,)
    assert bool(jnp.all(jnp.isfinite(recon)))
    assert bool(jnp.all(jnp.isfinite(loss)))
    # recon rows are exactly-normalized softmax outputs -> sum to 1 (f32 roundoff)
    assert jnp.allclose(jnp.sum(recon, axis=1), 1.0, atol=1e-3)

    # Check each batch block against a pure-JAX f32 reference (tolerances allow
    # for bf16 MXU matmuls / bf16 transcendentals on v6e+ and the log-softmax
    # loss form).
    for b in range(NB):
        sl = slice(b * BATCH, (b + 1) * BATCH)
        r_ref, l_ref, d_ref = ntm_reference(params, x[sl], eps[sl])
        assert jnp.allclose(recon[sl], r_ref, atol=5e-2)
        assert jnp.allclose(dt_vec[sl], d_ref, atol=5e-2)
        assert jnp.allclose(loss[b], l_ref, rtol=3e-2, atol=5e-2)

    print("KERNEL_OK")
</pallas_src>

<mosaic_0001>
module attributes {stable_mosaic.version = 11 : i64} {
  func.func @ntm_kernel(%arg0: i32, %arg1: memref<128x128xf32, #tpu.memory_space<vmem>>, %arg2: memref<128x16xf32, #tpu.memory_space<vmem>>, %arg3: memref<128x64xbf16, #tpu.memory_space<vmem>>, %arg4: memref<64x64xbf16, #tpu.memory_space<vmem>>, %arg5: memref<64x32xbf16, #tpu.memory_space<vmem>>, %arg6: memref<16x32xbf16, #tpu.memory_space<vmem>>, %arg7: memref<32x128xbf16, #tpu.memory_space<vmem>>, %arg8: memref<2x64xf32, #tpu.memory_space<vmem>>, %arg9: memref<3x32xf32, #tpu.memory_space<vmem>>, %arg10: memref<3x128xf32, #tpu.memory_space<vmem>>, %arg11: memref<128x128xf32, #tpu.memory_space<vmem>>, %arg12: memref<128x32xf32, #tpu.memory_space<vmem>>, %arg13: memref<1x1x1xf32, #tpu.memory_space<vmem>>) attributes {dimension_semantics = [#tpu.dimension_semantics<parallel>], iteration_bounds = array<i64: 4>, scalar_prefetch = 0 : i64, scratch_operands = 0 : i64, tpu.core_type = #tpu.core_type<tc>, window_params = [{transform_indices = @transform_0, window_bounds = array<i64: 128, 128>}, {transform_indices = @transform_1, window_bounds = array<i64: 128, 16>}, {pipeline_mode = #tpu.pipeline_mode<synchronous>, transform_indices = @transform_2, window_bounds = array<i64: 128, 64>}, {pipeline_mode = #tpu.pipeline_mode<synchronous>, transform_indices = @transform_3, window_bounds = array<i64: 64, 64>}, {pipeline_mode = #tpu.pipeline_mode<synchronous>, transform_indices = @transform_4, window_bounds = array<i64: 64, 32>}, {pipeline_mode = #tpu.pipeline_mode<synchronous>, transform_indices = @transform_5, window_bounds = array<i64: 16, 32>}, {pipeline_mode = #tpu.pipeline_mode<synchronous>, transform_indices = @transform_6, window_bounds = array<i64: 32, 128>}, {pipeline_mode = #tpu.pipeline_mode<synchronous>, transform_indices = @transform_7, window_bounds = array<i64: 2, 64>}, {pipeline_mode = #tpu.pipeline_mode<synchronous>, transform_indices = @transform_8, window_bounds = array<i64: 3, 32>}, {pipeline_mode = #tpu.pipeline_mode<synchronous>, transform_indices = @transform_9, window_bounds = array<i64: 3, 128>}, {transform_indices = @transform_10, window_bounds = array<i64: 128, 128>}, {transform_indices = @transform_11, window_bounds = array<i64: 128, 32>}, {transform_indices = @transform_12, window_bounds = array<i64: 1, 1, 1>}]} {
    %c0 = arith.constant 0 : index
    %c0_0 = arith.constant 0 : index
    %0 = vector.load %arg1[%c0, %c0_0] : memref<128x128xf32, #tpu.memory_space<vmem>>, vector<128x128xf32>
    %c0_1 = arith.constant 0 : index
    %c0_2 = arith.constant 0 : index
    %1 = vector.load %arg2[%c0_1, %c0_2] : memref<128x16xf32, #tpu.memory_space<vmem>>, vector<128x16xf32>
    %c0_3 = arith.constant 0 : index
    %c0_4 = arith.constant 0 : index
    %2 = vector.load %arg8[%c0_3, %c0_4] : memref<2x64xf32, #tpu.memory_space<vmem>>, vector<2x64xf32>
    %c0_5 = arith.constant 0 : index
    %c0_6 = arith.constant 0 : index
    %3 = vector.load %arg9[%c0_5, %c0_6] : memref<3x32xf32, #tpu.memory_space<vmem>>, vector<3x32xf32>
    %c0_7 = arith.constant 0 : index
    %c0_8 = arith.constant 0 : index
    %4 = vector.load %arg10[%c0_7, %c0_8] : memref<3x128xf32, #tpu.memory_space<vmem>>, vector<3x128xf32>
    %5 = arith.truncf %0 : vector<128x128xf32> to vector<128x128xbf16>
    %c0_9 = arith.constant 0 : index
    %c0_10 = arith.constant 0 : index
    %6 = vector.load %arg3[%c0_9, %c0_10] : memref<128x64xbf16, #tpu.memory_space<vmem>>, vector<128x64xbf16>
    %cst = arith.constant dense<0.000000e+00> : vector<128x64xf32>
    %7 = tpu.matmul %5, %6, %cst {dimension_numbers = #tpu.dot_dimension_numbers<[1], [0], [0], [1], [0, 0, 1, 1], [], []>} : vector<128x128xbf16>, vector<128x64xbf16>, vector<128x64xf32> -> vector<128x64xf32>
    %8 = vector.extract_strided_slice %2 {offsets = [0, 0], sizes = [1, 64], strides = [1, 1]} : vector<2x64xf32> to vector<1x64xf32>
    %9 = vector.broadcast %8 : vector<1x64xf32> to vector<128x64xf32>
    %10 = arith.addf %7, %9 : vector<128x64xf32>
    %11 = arith.truncf %10 : vector<128x64xf32> to vector<128x64xbf16>
    %cst_11 = arith.constant 0.000000e+00 : bf16
    %12 = vector.broadcast %cst_11 : bf16 to vector<128x64xbf16>
    %13 = arith.maximumf %11, %12 : vector<128x64xbf16>
    %14 = math.absf %11 : vector<128x64xbf16>
    %cst_12 = arith.constant 0.000000e+00 : bf16
    %15 = vector.broadcast %cst_12 : bf16 to vector<128x64xbf16>
    %16 = arith.subf %15, %14 : vector<128x64xbf16>
    %17 = math.exp %16 : vector<128x64xbf16>
    %cst_13 = arith.constant 1.000000e+00 : bf16
    %18 = vector.broadcast %cst_13 : bf16 to vector<128x64xbf16>
    %19 = arith.addf %18, %17 : vector<128x64xbf16>
    %20 = math.log %19 : vector<128x64xbf16>
    %21 = arith.addf %13, %20 : vector<128x64xbf16>
    %c0_14 = arith.constant 0 : index
    %c0_15 = arith.constant 0 : index
    %22 = vector.load %arg4[%c0_14, %c0_15] : memref<64x64xbf16, #tpu.memory_space<vmem>>, vector<64x64xbf16>
    %cst_16 = arith.constant dense<0.000000e+00> : vector<128x64xf32>
    %23 = tpu.matmul %21, %22, %cst_16 {dimension_numbers = #tpu.dot_dimension_numbers<[1], [0], [0], [1], [0, 0, 1, 1], [], []>} : vector<128x64xbf16>, vector<64x64xbf16>, vector<128x64xf32> -> vector<128x64xf32>
    %24 = vector.extract_strided_slice %2 {offsets = [1, 0], sizes = [1, 64], strides = [1, 1]} : vector<2x64xf32> to vector<1x64xf32>
    %25 = vector.broadcast %24 : vector<1x64xf32> to vector<128x64xf32>
    %26 = arith.addf %23, %25 : vector<128x64xf32>
    %27 = arith.truncf %26 : vector<128x64xf32> to vector<128x64xbf16>
    %cst_17 = arith.constant 0.000000e+00 : bf16
    %28 = vector.broadcast %cst_17 : bf16 to vector<128x64xbf16>
    %29 = arith.maximumf %27, %28 : vector<128x64xbf16>
    %30 = math.absf %27 : vector<128x64xbf16>
    %cst_18 = arith.constant 0.000000e+00 : bf16
    %31 = vector.broadcast %cst_18 : bf16 to vector<128x64xbf16>
    %32 = arith.subf %31, %30 : vector<128x64xbf16>
    %33 = math.exp %32 : vector<128x64xbf16>
    %cst_19 = arith.constant 1.000000e+00 : bf16
    %34 = vector.broadcast %cst_19 : bf16 to vector<128x64xbf16>
    %35 = arith.addf %34, %33 : vector<128x64xbf16>
    %36 = math.log %35 : vector<128x64xbf16>
    %37 = arith.addf %29, %36 : vector<128x64xbf16>
    %c0_20 = arith.constant 0 : index
    %c0_21 = arith.constant 0 : index
    %38 = vector.load %arg5[%c0_20, %c0_21] : memref<64x32xbf16, #tpu.memory_space<vmem>>, vector<64x32xbf16>
    %cst_22 = arith.constant dense<0.000000e+00> : vector<128x32xf32>
    %39 = tpu.matmul %37, %38, %cst_22 {dimension_numbers = #tpu.dot_dimension_numbers<[1], [0], [0], [1], [0, 0, 1, 1], [], []>} : vector<128x64xbf16>, vector<64x32xbf16>, vector<128x32xf32> -> vector<128x32xf32>
    %40 = vector.extract_strided_slice %3 {offsets = [0, 0], sizes = [1, 32], strides = [1, 1]} : vector<3x32xf32> to vector<1x32xf32>
    %41 = vector.broadcast %40 : vector<1x32xf32> to vector<128x32xf32>
    %42 = arith.addf %39, %41 : vector<128x32xf32>
    %43 = vector.extract_strided_slice %3 {offsets = [1, 0], sizes = [1, 32], strides = [1, 1]} : vector<3x32xf32> to vector<1x32xf32>
    %44 = vector.extract_strided_slice %3 {offsets = [2, 0], sizes = [1, 32], strides = [1, 1]} : vector<3x32xf32> to vector<1x32xf32>
    %cst_23 = arith.constant dense<0.000000e+00> : vector<32xf32>
    %45 = vector.multi_reduction <add>, %42, %cst_23 [0] : vector<128x32xf32> to vector<32xf32>
    %46 = vector.shape_cast %45 : vector<32xf32> to vector<1x32xf32>
    %cst_24 = arith.constant 1.280000e+02 : f32
    %47 = vector.broadcast %cst_24 : f32 to vector<1x32xf32>
    %48 = arith.divf %46, %47 : vector<1x32xf32>
    %49 = vector.broadcast %48 : vector<1x32xf32> to vector<128x32xf32>
    %50 = arith.subf %42, %49 : vector<128x32xf32>
    %51 = arith.mulf %50, %50 : vector<128x32xf32>
    %cst_25 = arith.constant dense<0.000000e+00> : vector<32xf32>
    %52 = vector.multi_reduction <add>, %51, %cst_25 [0] : vector<128x32xf32> to vector<32xf32>
    %53 = vector.shape_cast %52 : vector<32xf32> to vector<1x32xf32>
    %cst_26 = arith.constant 1.280000e+02 : f32
    %54 = vector.broadcast %cst_26 : f32 to vector<1x32xf32>
    %55 = arith.divf %53, %54 : vector<1x32xf32>
    %cst_27 = arith.constant 9.99999974E-6 : f32
    %56 = vector.broadcast %cst_27 : f32 to vector<1x32xf32>
    %57 = arith.addf %55, %56 : vector<1x32xf32>
    %58 = math.rsqrt %57 : vector<1x32xf32>
    %59 = vector.broadcast %58 : vector<1x32xf32> to vector<128x32xf32>
    %60 = arith.mulf %50, %59 : vector<128x32xf32>
    %61 = vector.broadcast %43 : vector<1x32xf32> to vector<128x32xf32>
    %62 = arith.mulf %60, %61 : vector<128x32xf32>
    %63 = vector.broadcast %44 : vector<1x32xf32> to vector<128x32xf32>
    %64 = arith.addf %62, %63 : vector<128x32xf32>
    %65 = vector.extract_strided_slice %64 {offsets = [0, 0], sizes = [128, 16], strides = [1, 1]} : vector<128x32xf32> to vector<128x16xf32>
    %66 = vector.extract_strided_slice %64 {offsets = [0, 16], sizes = [128, 16], strides = [1, 1]} : vector<128x32xf32> to vector<128x16xf32>
    %cst_28 = arith.constant 5.000000e-01 : f32
    %67 = vector.broadcast %cst_28 : f32 to vector<128x16xf32>
    %68 = arith.mulf %67, %66 : vector<128x16xf32>
    %69 = math.exp %68 : vector<128x16xf32>
    %70 = arith.mulf %69, %69 : vector<128x16xf32>
    %71 = arith.mulf %69, %1 : vector<128x16xf32>
    %72 = arith.addf %65, %71 : vector<128x16xf32>
    %cst_29 = arith.constant dense<0xFF800000> : vector<128xf32>
    %73 = vector.multi_reduction <maximumf>, %72, %cst_29 [1] : vector<128x16xf32> to vector<128xf32>
    %74 = vector.shape_cast %73 : vector<128xf32> to vector<128x1xf32>
    %75 = vector.broadcast %74 : vector<128x1xf32> to vector<128x16xf32>
    %76 = arith.subf %72, %75 : vector<128x16xf32>
    %77 = math.exp %76 : vector<128x16xf32>
    %cst_30 = arith.constant dense<0.000000e+00> : vector<128xf32>
    %78 = vector.multi_reduction <add>, %77, %cst_30 [1] : vector<128x16xf32> to vector<128xf32>
    %79 = vector.shape_cast %78 : vector<128xf32> to vector<128x1xf32>
    %80 = vector.broadcast %79 : vector<128x1xf32> to vector<128x16xf32>
    %81 = arith.divf %77, %80 : vector<128x16xf32>
    %82 = arith.truncf %81 : vector<128x16xf32> to vector<128x16xbf16>
    %c0_31 = arith.constant 0 : index
    %c0_32 = arith.constant 0 : index
    %83 = vector.load %arg6[%c0_31, %c0_32] : memref<16x32xbf16, #tpu.memory_space<vmem>>, vector<16x32xbf16>
    %cst_33 = arith.constant dense<0.000000e+00> : vector<128x32xf32>
    %84 = tpu.matmul %82, %83, %cst_33 {dimension_numbers = #tpu.dot_dimension_numbers<[1], [0], [0], [1], [0, 0, 1, 1], [], []>} : vector<128x16xbf16>, vector<16x32xbf16>, vector<128x32xf32> -> vector<128x32xf32>
    %85 = arith.truncf %84 : vector<128x32xf32> to vector<128x32xbf16>
    %86 = math.tanh %85 : vector<128x32xbf16>
    %c0_34 = arith.constant 0 : index
    %c0_35 = arith.constant 0 : index
    %87 = vector.load %arg7[%c0_34, %c0_35] : memref<32x128xbf16, #tpu.memory_space<vmem>>, vector<32x128xbf16>
    %cst_36 = arith.constant dense<0.000000e+00> : vector<128x128xf32>
    %88 = tpu.matmul %86, %87, %cst_36 {dimension_numbers = #tpu.dot_dimension_numbers<[1], [0], [0], [1], [0, 0, 1, 1], [], []>} : vector<128x32xbf16>, vector<32x128xbf16>, vector<128x128xf32> -> vector<128x128xf32>
    %89 = vector.extract_strided_slice %4 {offsets = [0, 0], sizes = [1, 128], strides = [1, 1]} : vector<3x128xf32> to vector<1x128xf32>
    %90 = vector.broadcast %89 : vector<1x128xf32> to vector<128x128xf32>
    %91 = arith.addf %88, %90 : vector<128x128xf32>
    %92 = vector.extract_strided_slice %4 {offsets = [1, 0], sizes = [1, 128], strides = [1, 1]} : vector<3x128xf32> to vector<1x128xf32>
    %93 = vector.extract_strided_slice %4 {offsets = [2, 0], sizes = [1, 128], strides = [1, 1]} : vector<3x128xf32> to vector<1x128xf32>
    %cst_37 = arith.constant dense<0.000000e+00> : vector<128xf32>
    %94 = vector.multi_reduction <add>, %91, %cst_37 [0] : vector<128x128xf32> to vector<128xf32>
    %95 = vector.shape_cast %94 : vector<128xf32> to vector<1x128xf32>
    %cst_38 = arith.constant 1.280000e+02 : f32
    %96 = vector.broadcast %cst_38 : f32 to vector<1x128xf32>
    %97 = arith.divf %95, %96 : vector<1x128xf32>
    %98 = vector.broadcast %97 : vector<1x128xf32> to vector<128x128xf32>
    %99 = arith.subf %91, %98 : vector<128x128xf32>
    %100 = arith.mulf %99, %99 : vector<128x128xf32>
    %cst_39 = arith.constant dense<0.000000e+00> : vector<128xf32>
    %101 = vector.multi_reduction <add>, %100, %cst_39 [0] : vector<128x128xf32> to vector<128xf32>
    %102 = vector.shape_cast %101 : vector<128xf32> to vector<1x128xf32>
    %cst_40 = arith.constant 1.280000e+02 : f32
    %103 = vector.broadcast %cst_40 : f32 to vector<1x128xf32>
    %104 = arith.divf %102, %103 : vector<1x128xf32>
    %cst_41 = arith.constant 9.99999974E-6 : f32
    %105 = vector.broadcast %cst_41 : f32 to vector<1x128xf32>
    %106 = arith.addf %104, %105 : vector<1x128xf32>
    %107 = math.rsqrt %106 : vector<1x128xf32>
    %108 = vector.broadcast %107 : vector<1x128xf32> to vector<128x128xf32>
    %109 = arith.mulf %99, %108 : vector<128x128xf32>
    %110 = vector.broadcast %92 : vector<1x128xf32> to vector<128x128xf32>
    %111 = arith.mulf %109, %110 : vector<128x128xf32>
    %112 = vector.broadcast %93 : vector<1x128xf32> to vector<128x128xf32>
    %113 = arith.addf %111, %112 : vector<128x128xf32>
    %cst_42 = arith.constant dense<0xFF800000> : vector<128xf32>
    %114 = vector.multi_reduction <maximumf>, %113, %cst_42 [1] : vector<128x128xf32> to vector<128xf32>
    %115 = vector.shape_cast %114 : vector<128xf32> to vector<128x1xf32>
    %116 = vector.broadcast %115 : vector<128x1xf32> to vector<128x128xf32>
    %117 = arith.subf %113, %116 : vector<128x128xf32>
    %118 = arith.truncf %117 : vector<128x128xf32> to vector<128x128xbf16>
    %119 = math.exp %118 : vector<128x128xbf16>
    %120 = arith.extf %119 : vector<128x128xbf16> to vector<128x128xf32>
    %cst_43 = arith.constant dense<0.000000e+00> : vector<128xf32>
    %121 = vector.multi_reduction <add>, %120, %cst_43 [1] : vector<128x128xf32> to vector<128xf32>
    %122 = vector.shape_cast %121 : vector<128xf32> to vector<128x1xf32>
    %123 = vector.broadcast %122 : vector<128x1xf32> to vector<128x128xf32>
    %124 = arith.divf %120, %123 : vector<128x128xf32>
    %c0_44 = arith.constant 0 : index
    %c0_45 = arith.constant 0 : index
    %125 = vector.load %arg11[%c0_44, %c0_45] : memref<128x128xf32, #tpu.memory_space<vmem>>, vector<128x128xf32>
    tpu.vector_store %arg11[%c0_44, %c0_45], %124 {strides = array<i32>} : memref<128x128xf32, #tpu.memory_space<vmem>>, vector<128x128xf32>,
    %126 = arith.extf %86 : vector<128x32xbf16> to vector<128x32xf32>
    %c0_46 = arith.constant 0 : index
    %c0_47 = arith.constant 0 : index
    %127 = vector.load %arg12[%c0_46, %c0_47] : memref<128x32xf32, #tpu.memory_space<vmem>>, vector<128x32xf32>
    tpu.vector_store %arg12[%c0_46, %c0_47], %126 {strides = array<i32>} : memref<128x32xf32, #tpu.memory_space<vmem>>, vector<128x32xf32>,
    %128 = vector.broadcast %115 : vector<128x1xf32> to vector<128x128xf32>
    %129 = arith.subf %113, %128 : vector<128x128xf32>
    %130 = math.log %122 : vector<128x1xf32>
    %131 = vector.broadcast %130 : vector<128x1xf32> to vector<128x128xf32>
    %132 = arith.subf %129, %131 : vector<128x128xf32>
    %133 = arith.mulf %0, %132 : vector<128x128xf32>
    %cst_48 = arith.constant dense<0.000000e+00> : vector<128xf32>
    %134 = vector.multi_reduction <add>, %133, %cst_48 [1] : vector<128x128xf32> to vector<128xf32>
    %135 = vector.shape_cast %134 : vector<128xf32> to vector<128x1xf32>
    %cst_49 = arith.constant 0.000000e+00 : f32
    %136 = vector.broadcast %cst_49 : f32 to vector<128x1xf32>
    %137 = arith.subf %136, %135 : vector<128x1xf32>
    %cst_50 = arith.constant 1.00502515 : f32
    %138 = vector.broadcast %cst_50 : f32 to vector<128x16xf32>
    %139 = arith.mulf %70, %138 : vector<128x16xf32>
    %140 = arith.mulf %65, %65 : vector<128x16xf32>
    %cst_51 = arith.constant 1.00502515 : f32
    %141 = vector.broadcast %cst_51 : f32 to vector<128x16xf32>
    %142 = arith.mulf %140, %141 : vector<128x16xf32>
    %cst_52 = arith.constant -0.00501254201 : f32
    %143 = vector.broadcast %cst_52 : f32 to vector<128x16xf32>
    %144 = arith.subf %143, %66 : vector<128x16xf32>
    %145 = arith.addf %139, %142 : vector<128x16xf32>
    %146 = arith.addf %145, %144 : vector<128x16xf32>
    %cst_53 = arith.constant dense<0.000000e+00> : vector<128xf32>
    %147 = vector.multi_reduction <add>, %146, %cst_53 [1] : vector<128x16xf32> to vector<128xf32>
    %148 = vector.shape_cast %147 : vector<128xf32> to vector<128x1xf32>
    %cst_54 = arith.constant 1.600000e+01 : f32
    %149 = vector.broadcast %cst_54 : f32 to vector<128x1xf32>
    %150 = arith.subf %148, %149 : vector<128x1xf32>
    %cst_55 = arith.constant 5.000000e-01 : f32
    %151 = vector.broadcast %cst_55 : f32 to vector<128x1xf32>
    %152 = arith.mulf %151, %150 : vector<128x1xf32>
    %153 = arith.addf %137, %152 : vector<128x1xf32>
    %cst_56 = arith.constant dense<0.000000e+00> : vector<1xf32>
    %154 = vector.multi_reduction <add>, %153, %cst_56 [0] : vector<128x1xf32> to vector<1xf32>
    %155 = vector.shape_cast %154 : vector<1xf32> to vector<1x1xf32>
    %cst_57 = arith.constant 7.812500e-03 : f32
    %156 = vector.broadcast %cst_57 : f32 to vector<1x1xf32>
    %157 = arith.mulf %155, %156 : vector<1x1xf32>
    %c0_58 = arith.constant 0 : index
    %c0_59 = arith.constant 0 : index
    %c0_60 = arith.constant 0 : index
    %158 = vector.load %arg13[%c0_58, %c0_59, %c0_60] : memref<1x1x1xf32, #tpu.memory_space<vmem>>, vector<1x1x1xf32>
    %159 = vector.shape_cast %158 : vector<1x1x1xf32> to vector<1x1xf32>
    %160 = vector.shape_cast %157 : vector<1x1xf32> to vector<1x1x1xf32>
    tpu.vector_store %arg13[%c0_58, %c0_59, %c0_60], %160 {strides = array<i32>} : memref<1x1x1xf32, #tpu.memory_space<vmem>>, vector<1x1x1xf32>,
    return
  }
  func.func @transform_0(%arg0: i32) -> (i32, i32) {
    %c0_i32 = arith.constant 0 : i32
    %c0_i32_0 = arith.constant 0 : i32
    return %arg0, %c0_i32 : i32, i32
  }
  func.func @transform_1(%arg0: i32) -> (i32, i32) {
    %c0_i32 = arith.constant 0 : i32
    %c0_i32_0 = arith.constant 0 : i32
    return %arg0, %c0_i32 : i32, i32
  }
  func.func @transform_2(%arg0: i32) -> (i32, i32) {
    %c0_i32 = arith.constant 0 : i32
    %c0_i32_0 = arith.constant 0 : i32
    %c0_i32_1 = arith.constant 0 : i32
    return %c0_i32, %c0_i32_0 : i32, i32
  }
  func.func @transform_3(%arg0: i32) -> (i32, i32) {
    %c0_i32 = arith.constant 0 : i32
    %c0_i32_0 = arith.constant 0 : i32
    %c0_i32_1 = arith.constant 0 : i32
    return %c0_i32, %c0_i32_0 : i32, i32
  }
  func.func @transform_4(%arg0: i32) -> (i32, i32) {
    %c0_i32 = arith.constant 0 : i32
    %c0_i32_0 = arith.constant 0 : i32
    %c0_i32_1 = arith.constant 0 : i32
    return %c0_i32, %c0_i32_0 : i32, i32
  }
  func.func @transform_5(%arg0: i32) -> (i32, i32) {
    %c0_i32 = arith.constant 0 : i32
    %c0_i32_0 = arith.constant 0 : i32
    %c0_i32_1 = arith.constant 0 : i32
    return %c0_i32, %c0_i32_0 : i32, i32
  }
  func.func @transform_6(%arg0: i32) -> (i32, i32) {
    %c0_i32 = arith.constant 0 : i32
    %c0_i32_0 = arith.constant 0 : i32
    %c0_i32_1 = arith.constant 0 : i32
    return %c0_i32, %c0_i32_0 : i32, i32
  }
  func.func @transform_7(%arg0: i32) -> (i32, i32) {
    %c0_i32 = arith.constant 0 : i32
    %c0_i32_0 = arith.constant 0 : i32
    %c0_i32_1 = arith.constant 0 : i32
    return %c0_i32, %c0_i32_0 : i32, i32
  }
  func.func @transform_8(%arg0: i32) -> (i32, i32) {
    %c0_i32 = arith.constant 0 : i32
    %c0_i32_0 = arith.constant 0 : i32
    %c0_i32_1 = arith.constant 0 : i32
    return %c0_i32, %c0_i32_0 : i32, i32
  }
  func.func @transform_9(%arg0: i32) -> (i32, i32) {
    %c0_i32 = arith.constant 0 : i32
    %c0_i32_0 = arith.constant 0 : i32
    %c0_i32_1 = arith.constant 0 : i32
    return %c0_i32, %c0_i32_0 : i32, i32
  }
  func.func @transform_10(%arg0: i32) -> (i32, i32) {
    %c0_i32 = arith.constant 0 : i32
    %c0_i32_0 = arith.constant 0 : i32
    return %arg0, %c0_i32 : i32, i32
  }
  func.func @transform_11(%arg0: i32) -> (i32, i32) {
    %c0_i32 = arith.constant 0 : i32
    %c0_i32_0 = arith.constant 0 : i32
    return %arg0, %c0_i32 : i32, i32
  }
  func.func @transform_12(%arg0: i32) -> (i32, i32, i32) {
    %c0_i32 = arith.constant 0 : i32
    %c0_i32_0 = arith.constant 0 : i32
    %c0_i32_1 = arith.constant 0 : i32
    return %arg0, %c0_i32, %c0_i32_0 : i32, i32, i32
  }
}

</mosaic_0001>

<llo_original>
// kernel: ntm_forward.1
$region0: #{ntm_forward.1}
  #allocation0 [shape = 'u32[]', space=smem, size = 0x4, offset = 0x4, fixed_abs, tag = 'smem constant byte address 0x4 - core index']
  #allocation1 [shape = 'u32[144,128]{1,0:T(1,128)}', space=vmem, size = 0x12000, scoped, tag = 'internal scratch']
  %s0 = inlined_call_operand.vmem [shape: f32[512,128], index: 0, kind: input, shape index: {}]
  %s1 = inlined_call_operand.vmem [shape: f32[512,16], index: 1, kind: input, shape index: {}]
  %s2 = inlined_call_operand.vmem [shape: bf16[128,64], index: 2, kind: input, shape index: {}]
  %s3 = inlined_call_operand.vmem [shape: bf16[64,64], index: 3, kind: input, shape index: {}]
  %s4 = inlined_call_operand.vmem [shape: bf16[64,32], index: 4, kind: input, shape index: {}]
  %s5 = inlined_call_operand.vmem [shape: bf16[16,32], index: 5, kind: input, shape index: {}]
  %s6 = inlined_call_operand.vmem [shape: bf16[32,128], index: 6, kind: input, shape index: {}]
  %s7 = inlined_call_operand.vmem [shape: f32[2,64], index: 7, kind: input, shape index: {}]
  %s8 = inlined_call_operand.vmem [shape: f32[3,32], index: 8, kind: input, shape index: {}]
  %s9 = inlined_call_operand.vmem [shape: f32[3,128], index: 9, kind: input, shape index: {}]
  %s10 = inlined_call_operand.hbm [shape: f32[512,128], index: 10, kind: output, shape index: {0}]
  %s11 = inlined_call_operand.vmem [shape: f32[512,32], index: 11, kind: output, shape index: {1}]
  %s12 = inlined_call_operand.vmem [shape: f32[4,1,1], index: 12, kind: output, shape index: {2}]
  %13 = xla_tuple %s10, %s11, %s12
  %s14 = sld [smem:[#allocation0]]
  $region89: #{ntm_forward.1} parent=0
    _
  %s16 = ssub.s32 1, %s14
  %s17 = scalar_select 0, %s16, %s14
  $region1: #{ntm_forward.1} parent=0
    #allocation2 [shape = 'u8[131072]{0}', space=vmem, size = 0x20000, scoped, tag = 'output window, operand 0']
    #allocation3 [shape = 's32[2]{0}', space=sflag, size = 0x8, scoped, tag = 'scoped memory for ntm_forward.1']
    %18 = vsyncpa [#allocation3], 0
    %s19 = scalar_lea.sflag [#allocation3], 1
    %20 = vsyncpa %s19, 0
    loop: start=0, step=1, limit=6
    $region2: #{ntm_forward.1} parent=1 // loop_pre_header
      _
    $region3: #{ntm_forward.1} parent=1 // loop_header
      %s22 = sphi 0, %s26
      %p23 = scmp.ge.s32.totalorder %s22, 6
      %s32 = sphi 0, %s34
      %s35 = sphi 0, %s32
      %s36 = sphi 0, %s35
      %s52 = sphi 0, %s36
      %s58 = sphi 0, %s60
      %s61 = sphi 0, %s58
      %s62 = sphi 0, %s61
      %s78 = sphi 0, %s62
      %s82 = sphi 0, %s82
      %s84 = sphi 0, %s82
      %s85 = sphi 0, %s84
      %s99 = sphi 0, %s85
      %s103 = sphi 0, %s103
      %s105 = sphi 0, %s103
      %s106 = sphi 0, %s105
      %s120 = sphi 0, %s106
      %s124 = sphi 0, %s124
      %s126 = sphi 0, %s124
      %s127 = sphi 0, %s126
      %s141 = sphi 0, %s127
      %s145 = sphi 0, %s145
      %s147 = sphi 0, %s145
      %s148 = sphi 0, %s147
      %s162 = sphi 0, %s148
      %s166 = sphi 0, %s166
      %s168 = sphi 0, %s166
      %s169 = sphi 0, %s168
      %s183 = sphi 0, %s169
      %s187 = sphi 0, %s187
      %s189 = sphi 0, %s187
      %s190 = sphi 0, %s189
      %s204 = sphi 0, %s190
      %s208 = sphi 0, %s208
      %s210 = sphi 0, %s208
      %s211 = sphi 0, %s210
      %s225 = sphi 0, %s211
      %s229 = sphi 0, %s229
      %s231 = sphi 0, %s229
      %s232 = sphi 0, %s231
      %s246 = sphi 0, %s232
      %s252 = sphi 0, %s254
      %s255 = sphi 0, %s252
      %s256 = sphi 0, %s255
      %s272 = sphi 0, %s256
      %s278 = sphi 0, %s280
      %s281 = sphi 0, %s278
      %s282 = sphi 0, %s281
      %s298 = sphi 0, %s282
      %s304 = sphi 0, %s306
      %s307 = sphi 0, %s304
      %s308 = sphi 0, %s307
      %s324 = sphi 0, %s308
    $region4: #{ntm_forward.1} parent=1 // loop_header_branch
      %25 = sbr.rel (%p23) target = $region8
    $region5: #{ntm_forward.1} parent=1 // loop_body
      %s27 = ssub.s32 %s22, 1
      %s28 = ssub.s32 %s22, 2
      %s29 = sadd.s32 %s22, 1
      %s30 = ssub.s32 %s22, %s29
      %p31 = scmp.eq.s32.totalorder %s30, 0
      %s33 = sadd.s32 %s32, 1
      %s34 = scalar_select %p31, %s32, %s33
      %p37 = pneg %p31
      %p38 = scmp.eq.s32.totalorder %s22, 3
      %p39 = por %p37, %p38
      %p40 = scmp.ne.s32.totalorder %s32, %s35
      %p41 = scmp.eq.s32.totalorder %s22, 0
      %p42 = por %p40, %p41
      %p43 = scmp.ne.s32.totalorder %s32, %s35
      %p44 = scmp.eq.s32.totalorder %s27, 3
      %p45 = por %p43, %p44
      %p46 = scmp.ne.s32.totalorder %s35, %s36
      %p47 = scmp.eq.s32.totalorder %s27, 0
      %p48 = por %p46, %p47
      %p49 = scmp.ne.s32.totalorder %s35, %s36
      %p50 = scmp.eq.s32.totalorder %s28, 3
      %p51 = por %p49, %p50
      %p53 = scmp.ne.s32.totalorder %s36, %s52
      %p54 = scmp.eq.s32.totalorder %s28, 0
      %p55 = por %p53, %p54
      %s56 = ssub.s32 %s22, %s29
      %p57 = scmp.eq.s32.totalorder %s56, 0
      %s59 = sadd.s32 %s58, 1
      %s60 = scalar_select %p57, %s58, %s59
      %p63 = pneg %p57
      %p64 = scmp.eq.s32.totalorder %s22, 3
      %p65 = por %p63, %p64
      %p66 = scmp.ne.s32.totalorder %s58, %s61
      %p67 = scmp.eq.s32.totalorder %s22, 0
      %p68 = por %p66, %p67
      %p69 = scmp.ne.s32.totalorder %s58, %s61
      %p70 = scmp.eq.s32.totalorder %s27, 3
      %p71 = por %p69, %p70
      %p72 = scmp.ne.s32.totalorder %s61, %s62
      %p73 = scmp.eq.s32.totalorder %s27, 0
      %p74 = por %p72, %p73
      %p75 = scmp.ne.s32.totalorder %s61, %s62
      %p76 = scmp.eq.s32.totalorder %s28, 3
      %p77 = por %p75, %p76
      %p79 = scmp.ne.s32.totalorder %s62, %s78
      %p80 = scmp.eq.s32.totalorder %s28, 0
      %p81 = por %p79, %p80
      %s83 = sadd.s32 %s82, 1
      %p86 = scmp.eq.s32.totalorder %s22, 3
      %p87 = scmp.ne.s32.totalorder %s82, %s84
      %p88 = scmp.eq.s32.totalorder %s22, 0
      %p89 = por %p87, %p88
      %p90 = scmp.ne.s32.totalorder %s82, %s84
      %p91 = scmp.eq.s32.totalorder %s27, 3
      %p92 = por %p90, %p91
      %p93 = scmp.ne.s32.totalorder %s84, %s85
      %p94 = scmp.eq.s32.totalorder %s27, 0
      %p95 = por %p93, %p94
      %p96 = scmp.ne.s32.totalorder %s84, %s85
      %p97 = scmp.eq.s32.totalorder %s28, 3
      %p98 = por %p96, %p97
      %p100 = scmp.ne.s32.totalorder %s85, %s99
      %p101 = scmp.eq.s32.totalorder %s28, 0
      %p102 = por %p100, %p101
      %s104 = sadd.s32 %s103, 1
      %p107 = scmp.eq.s32.totalorder %s22, 3
      %p108 = scmp.ne.s32.totalorder %s103, %s105
      %p109 = scmp.eq.s32.totalorder %s22, 0
      %p110 = por %p108, %p109
      %p111 = scmp.ne.s32.totalorder %s103, %s105
      %p112 = scmp.eq.s32.totalorder %s27, 3
      %p113 = por %p111, %p112
      %p114 = scmp.ne.s32.totalorder %s105, %s106
      %p115 = scmp.eq.s32.totalorder %s27, 0
      %p116 = por %p114, %p115
      %p117 = scmp.ne.s32.totalorder %s105, %s106
      %p118 = scmp.eq.s32.totalorder %s28, 3
      %p119 = por %p117, %p118
      %p121 = scmp.ne.s32.totalorder %s106, %s120
      %p122 = scmp.eq.s32.totalorder %s28, 0
      %p123 = por %p121, %p122
      %s125 = sadd.s32 %s124, 1
      %p128 = scmp.eq.s32.totalorder %s22, 3
      %p129 = scmp.ne.s32.totalorder %s124, %s126
      %p130 = scmp.eq.s32.totalorder %s22, 0
      %p131 = por %p129, %p130
      %p132 = scmp.ne.s32.totalorder %s124, %s126
      %p133 = scmp.eq.s32.totalorder %s27, 3
      %p134 = por %p132, %p133
      %p135 = scmp.ne.s32.totalorder %s126, %s127
      %p136 = scmp.eq.s32.totalorder %s27, 0
      %p137 = por %p135, %p136
      %p138 = scmp.ne.s32.totalorder %s126, %s127
      %p139 = scmp.eq.s32.totalorder %s28, 3
      %p140 = por %p138, %p139
      %p142 = scmp.ne.s32.totalorder %s127, %s141
      %p143 = scmp.eq.s32.totalorder %s28, 0
      %p144 = por %p142, %p143
      %s146 = sadd.s32 %s145, 1
      %p149 = scmp.eq.s32.totalorder %s22, 3
      %p150 = scmp.ne.s32.totalorder %s145, %s147
      %p151 = scmp.eq.s32.totalorder %s22, 0
      %p152 = por %p150, %p151
      %p153 = scmp.ne.s32.totalorder %s145, %s147
      %p154 = scmp.eq.s32.totalorder %s27, 3
      %p155 = por %p153, %p154
      %p156 = scmp.ne.s32.totalorder %s147, %s148
      %p157 = scmp.eq.s32.totalorder %s27, 0
      %p158 = por %p156, %p157
      %p159 = scmp.ne.s32.totalorder %s147, %s148
      %p160 = scmp.eq.s32.totalorder %s28, 3
      %p161 = por %p159, %p160
      %p163 = scmp.ne.s32.totalorder %s148, %s162
      %p164 = scmp.eq.s32.totalorder %s28, 0
      %p165 = por %p163, %p164
      %s167 = sadd.s32 %s166, 1
      %p170 = scmp.eq.s32.totalorder %s22, 3
      %p171 = scmp.ne.s32.totalorder %s166, %s168
      %p172 = scmp.eq.s32.totalorder %s22, 0
      %p173 = por %p171, %p172
      %p174 = scmp.ne.s32.totalorder %s166, %s168
      %p175 = scmp.eq.s32.totalorder %s27, 3
      %p176 = por %p174, %p175
      %p177 = scmp.ne.s32.totalorder %s168, %s169
      %p178 = scmp.eq.s32.totalorder %s27, 0
      %p179 = por %p177, %p178
      %p180 = scmp.ne.s32.totalorder %s168, %s169
      %p181 = scmp.eq.s32.totalorder %s28, 3
      %p182 = por %p180, %p181
      %p184 = scmp.ne.s32.totalorder %s169, %s183
      %p185 = scmp.eq.s32.totalorder %s28, 0
      %p186 = por %p184, %p185
      %s188 = sadd.s32 %s187, 1
      %p191 = scmp.eq.s32.totalorder %s22, 3
      %p192 = scmp.ne.s32.totalorder %s187, %s189
      %p193 = scmp.eq.s32.totalorder %s22, 0
      %p194 = por %p192, %p193
      %p195 = scmp.ne.s32.totalorder %s187, %s189
      %p196 = scmp.eq.s32.totalorder %s27, 3
      %p197 = por %p195, %p196
      %p198 = scmp.ne.s32.totalorder %s189, %s190
      %p199 = scmp.eq.s32.totalorder %s27, 0
      %p200 = por %p198, %p199
      %p201 = scmp.ne.s32.totalorder %s189, %s190
      %p202 = scmp.eq.s32.totalorder %s28, 3
      %p203 = por %p201, %p202
      %p205 = scmp.ne.s32.totalorder %s190, %s204
      %p206 = scmp.eq.s32.totalorder %s28, 0
      %p207 = por %p205, %p206
      %s209 = sadd.s32 %s208, 1
      %p212 = scmp.eq.s32.totalorder %s22, 3
      %p213 = scmp.ne.s32.totalorder %s208, %s210
      %p214 = scmp.eq.s32.totalorder %s22, 0
      %p215 = por %p213, %p214
      %p216 = scmp.ne.s32.totalorder %s208, %s210
      %p217 = scmp.eq.s32.totalorder %s27, 3
      %p218 = por %p216, %p217
      %p219 = scmp.ne.s32.totalorder %s210, %s211
      %p220 = scmp.eq.s32.totalorder %s27, 0
      %p221 = por %p219, %p220
      %p222 = scmp.ne.s32.totalorder %s210, %s211
      %p223 = scmp.eq.s32.totalorder %s28, 3
      %p224 = por %p222, %p223
      %p226 = scmp.ne.s32.totalorder %s211, %s225
      %p227 = scmp.eq.s32.totalorder %s28, 0
      %p228 = por %p226, %p227
      %s230 = sadd.s32 %s229, 1
      %p233 = scmp.eq.s32.totalorder %s22, 3
      %p234 = scmp.ne.s32.totalorder %s229, %s231
      %p235 = scmp.eq.s32.totalorder %s22, 0
      %p236 = por %p234, %p235
      %p237 = scmp.ne.s32.totalorder %s229, %s231
      %p238 = scmp.eq.s32.totalorder %s27, 3
      %p239 = por %p237, %p238
      %p240 = scmp.ne.s32.totalorder %s231, %s232
      %p241 = scmp.eq.s32.totalorder %s27, 0
      %p242 = por %p240, %p241
      %p243 = scmp.ne.s32.totalorder %s231, %s232
      %p244 = scmp.eq.s32.totalorder %s28, 3
      %p245 = por %p243, %p244
      %p247 = scmp.ne.s32.totalorder %s232, %s246
      %p248 = scmp.eq.s32.totalorder %s28, 0
      %p249 = por %p247, %p248
      %s250 = ssub.s32 %s22, %s29
      %p251 = scmp.eq.s32.totalorder %s250, 0
      %s253 = sadd.s32 %s252, 1
      %s254 = scalar_select %p251, %s252, %s253
      %p257 = pneg %p251
      %p258 = scmp.eq.s32.totalorder %s22, 3
      %p259 = por %p257, %p258
      %p260 = scmp.ne.s32.totalorder %s252, %s255
      %p261 = scmp.eq.s32.totalorder %s22, 0
      %p262 = por %p260, %p261
      %p263 = scmp.ne.s32.totalorder %s252, %s255
      %p264 = scmp.eq.s32.totalorder %s27, 3
      %p265 = por %p263, %p264
      %p266 = scmp.ne.s32.totalorder %s255, %s256
      %p267 = scmp.eq.s32.totalorder %s27, 0
      %p268 = por %p266, %p267
      %p269 = scmp.ne.s32.totalorder %s255, %s256
      %p270 = scmp.eq.s32.totalorder %s28, 3
      %p271 = por %p269, %p270
      %p273 = scmp.ne.s32.totalorder %s256, %s272
      %p274 = scmp.eq.s32.totalorder %s28, 0
      %p275 = por %p273, %p274
      %s276 = ssub.s32 %s22, %s29
      %p277 = scmp.eq.s32.totalorder %s276, 0
      %s279 = sadd.s32 %s278, 1
      %s280 = scalar_select %p277, %s278, %s279
      %p283 = pneg %p277
      %p284 = scmp.eq.s32.totalorder %s22, 3
      %p285 = por %p283, %p284
      %p286 = scmp.ne.s32.totalorder %s278, %s281
      %p287 = scmp.eq.s32.totalorder %s22, 0
      %p288 = por %p286, %p287
      %p289 = scmp.ne.s32.totalorder %s278, %s281
      %p290 = scmp.eq.s32.totalorder %s27, 3
      %p291 = por %p289, %p290
      %p292 = scmp.ne.s32.totalorder %s281, %s282
      %p293 = scmp.eq.s32.totalorder %s27, 0
      %p294 = por %p292, %p293
      %p295 = scmp.ne.s32.totalorder %s281, %s282
      %p296 = scmp.eq.s32.totalorder %s28, 3
      %p297 = por %p295, %p296
      %p299 = scmp.ne.s32.totalorder %s282, %s298
      %p300 = scmp.eq.s32.totalorder %s28, 0
      %p301 = por %p299, %p300
      %s302 = ssub.s32 %s22, %s29
      %p303 = scmp.eq.s32.totalorder %s302, 0
      %s305 = sadd.s32 %s304, 1
      %s306 = scalar_select %p303, %s304, %s305
      %p309 = pneg %p303
      %p310 = scmp.eq.s32.totalorder %s22, 3
      %p311 = por %p309, %p310
      %p312 = scmp.ne.s32.totalorder %s304, %s307
      %p313 = scmp.eq.s32.totalorder %s22, 0
      %p314 = por %p312, %p313
      %p315 = scmp.ne.s32.totalorder %s304, %s307
      %p316 = scmp.eq.s32.totalorder %s27, 3
      %p317 = por %p315, %p316
      %p318 = scmp.ne.s32.totalorder %s307, %s308
      %p319 = scmp.eq.s32.totalorder %s27, 0
      %p320 = por %p318, %p319
      %p321 = scmp.ne.s32.totalorder %s307, %s308
      %p322 = scmp.eq.s32.totalorder %s28, 3
      %p323 = por %p321, %p322
      %p325 = scmp.ne.s32.totalorder %s308, %s324
      %p326 = scmp.eq.s32.totalorder %s28, 0
      %p327 = por %p325, %p326
      %p328 = scmp.le.s32.totalorder 1, %s22
      %p329 = scmp.lt.s32.totalorder %s22, 5
      %p330 = pnand %p328, %p329
      %p331 = pneg %p330
      // Predicated region
      $region9: #{ntm_forward.1} parent=5 // pred_check
        _
      $region10: #{ntm_forward.1} parent=5 // pred_check_branch
        %333 = sbr.rel (%p330) target = $region12
      $region11: #{ntm_forward.1} parent=5 // pred_region
        %s334 = ssub.s32 %s22, 1
        // Predicated region
        $region13: #{ntm_forward.1} parent=11 // pred_check
          %p335 = pneg %p95
        $region14: #{ntm_forward.1} parent=11 // pred_check_branch
          %337 = sbr.rel (%p335) target = $region16
        $region15: #{ntm_forward.1} parent=11 // pred_region
          _
        $region16: #{ntm_forward.1} parent=11 // pred_fallthru
          _
        // Predicated region
        $region17: #{ntm_forward.1} parent=11 // pred_check
          %p338 = pneg %p116
        $region18: #{ntm_forward.1} parent=11 // pred_check_branch
          %340 = sbr.rel (%p338) target = $region20
        $region19: #{ntm_forward.1} parent=11 // pred_region
          _
        $region20: #{ntm_forward.1} parent=11 // pred_fallthru
          _
        // Predicated region
        $region21: #{ntm_forward.1} parent=11 // pred_check
          %p341 = pneg %p137
        $region22: #{ntm_forward.1} parent=11 // pred_check_branch
          %343 = sbr.rel (%p341) target = $region24
        $region23: #{ntm_forward.1} parent=11 // pred_region
          _
        $region24: #{ntm_forward.1} parent=11 // pred_fallthru
          _
        // Predicated region
        $region25: #{ntm_forward.1} parent=11 // pred_check
          %p344 = pneg %p158
        $region26: #{ntm_forward.1} parent=11 // pred_check_branch
          %346 = sbr.rel (%p344) target = $region28
        $region27: #{ntm_forward.1} parent=11 // pred_region
          _
        $region28: #{ntm_forward.1} parent=11 // pred_fallthru
          _
        // Predicated region
        $region29: #{ntm_forward.1} parent=11 // pred_check
          %p347 = pneg %p179
        $region30: #{ntm_forward.1} parent=11 // pred_check_branch
          %349 = sbr.rel (%p347) target = $region32
        $region31: #{ntm_forward.1} parent=11 // pred_region
          _
        $region32: #{ntm_forward.1} parent=11 // pred_fallthru
          _
        // Predicated region
        $region33: #{ntm_forward.1} parent=11 // pred_check
          %p350 = pneg %p200
        $region34: #{ntm_forward.1} parent=11 // pred_check_branch
          %352 = sbr.rel (%p350) target = $region36
        $region35: #{ntm_forward.1} parent=11 // pred_region
          _
        $region36: #{ntm_forward.1} parent=11 // pred_fallthru
          _
        // Predicated region
        $region37: #{ntm_forward.1} parent=11 // pred_check
          %p353 = pneg %p221
        $region38: #{ntm_forward.1} parent=11 // pred_check_branch
          %355 = sbr.rel (%p353) target = $region40
        $region39: #{ntm_forward.1} parent=11 // pred_region
          _
        $region40: #{ntm_forward.1} parent=11 // pred_fallthru
          _
        // Predicated region
        $region41: #{ntm_forward.1} parent=11 // pred_check
          %p356 = pneg %p242
        $region42: #{ntm_forward.1} parent=11 // pred_check_branch
          %358 = sbr.rel (%p356) target = $region44
        $region43: #{ntm_forward.1} parent=11 // pred_region
          _
        $region44: #{ntm_forward.1} parent=11 // pred_fallthru
          _
      $region12: #{ntm_forward.1} parent=5 // pred_fallthru
        _
      %p359 = scmp.lt.s32.totalorder %s22, 4
      // Predicated region
      $region45: #{ntm_forward.1} parent=5 // pred_check
        %p360 = pneg %p359
      $region46: #{ntm_forward.1} parent=5 // pred_check_branch
        %362 = sbr.rel (%p360) target = $region48
      $region47: #{ntm_forward.1} parent=5 // pred_region
        // Predicated region
        $region49: #{ntm_forward.1} parent=47 // pred_check
          %p363 = pneg %p42
        $region50: #{ntm_forward.1} parent=47 // pred_check_branch
          %365 = sbr.rel (%p363) target = $region52
        $region51: #{ntm_forward.1} parent=47 // pred_region
          %s366 = smul.u32 16, %s22
          %p367 = scmp.lt.s32.totalorder %s366, 63
          %s368 = scalar_select %p367, %s366, 63
          %s369 = smul.addr %s368, 8
          %s370 = scalar_lea.vmem %s0, %s369
          %s371 = smul.u32 16, %s22
        $region52: #{ntm_forward.1} parent=47 // pred_fallthru
          _
        // Predicated region
        $region53: #{ntm_forward.1} parent=47 // pred_check
          %p372 = pneg %p68
        $region54: #{ntm_forward.1} parent=47 // pred_check_branch
          %374 = sbr.rel (%p372) target = $region56
        $region55: #{ntm_forward.1} parent=47 // pred_region
          %s375 = smul.u32 16, %s22
          %p376 = scmp.lt.s32.totalorder %s375, 63
          %s377 = scalar_select %p376, %s375, 63
          %s378 = smul.addr %s377, 8
          %s379 = scalar_lea.vmem %s1, %s378
          %s380 = smul.u32 16, %s22
        $region56: #{ntm_forward.1} parent=47 // pred_fallthru
          _
      $region48: #{ntm_forward.1} parent=5 // pred_fallthru
        _
      %p381 = scmp.le.s32.totalorder 1, %s22
      %p382 = scmp.lt.s32.totalorder %s22, 5
      %p383 = pnand %p381, %p382
      %p384 = pneg %p383
      // Predicated region
      $region57: #{ntm_forward.1} parent=5 // pred_check
        _
      $region58: #{ntm_forward.1} parent=5 // pred_check_branch
        %386 = sbr.rel (%p383) target = $region60
      $region59: #{ntm_forward.1} parent=5 // pred_region
        %s387 = ssub.s32 %s22, 1
        %s388 = smul.u32 16, %s27
        %p389 = scmp.lt.s32.totalorder %s388, 63
        %s390 = scalar_select %p389, %s388, 63
        %s391 = smul.addr %s390, 8
        %s392 = scalar_lea.vmem %s0, %s391
        %p393 = pneg %p48
        %p394 = pneg %p45
        %s395 = smul.u32 16, %s27
        %p396 = scmp.lt.s32.totalorder %s395, 63
        %s397 = scalar_select %p396, %s395, 63
        %s398 = smul.addr %s397, 8
        %s399 = scalar_lea.vmem %s1, %s398
        %p400 = pneg %p74
        %p401 = pneg %p71
        %p402 = pneg %p95
        %p403 = pneg %p92
        %p404 = pneg %p116
        %p405 = pneg %p113
        %p406 = pneg %p137
        %p407 = pneg %p134
        %p408 = pneg %p158
        %p409 = pneg %p155
        %p410 = pneg %p179
        %p411 = pneg %p176
        %p412 = pneg %p200
        %p413 = pneg %p197
        %p414 = pneg %p221
        %p415 = pneg %p218
        %p416 = pneg %p242
        %p417 = pneg %p239
        %p418 = pneg %p268
        %p419 = pneg %p265
        %s420 = sand.u32 %s255, 1
        %s421 = scalar_lea.sflag [#allocation3], %s420
        %s422 = sand.u32 %s255, 1
        %s423 = smul.addr %s422, 128
        %s424 = scalar_lea.vmem [#allocation2], %s423
        %p425 = pneg %p294
        %p426 = pneg %p291
        %s427 = smul.u32 16, %s27
        %p428 = scmp.lt.s32.totalorder %s427, 63
        %s429 = scalar_select %p428, %s427, 63
        %s430 = smul.addr %s429, 8
        %s431 = scalar_lea.vmem %s11, %s430
        %p432 = pneg %p320
        %p433 = pneg %p317
        %p434 = scmp.lt.s32.totalorder %s27, 3
        %s435 = scalar_select %p434, %s27, 3
        %s436 = scalar_lea.vmem %s12, %s435
        %s437 = smul.u32 16, %s27
        %p438 = scmp.lt.s32.totalorder %s437, 63
        %s439 = scalar_select %p438, %s437, 63
        %s440 = smul.addr %s439, 8
        %s441 = scalar_lea.vmem %s0, %s440
        %s442 = smul.u32 16, %s27
        %s443 = smul.u32 16, %s27
        %p444 = scmp.lt.s32.totalorder %s443, 63
        %s445 = scalar_select %p444, %s443, 63
        %s446 = smul.addr %s445, 8
        %s447 = scalar_lea.vmem %s1, %s446
        %s448 = smul.u32 16, %s27
        %s449 = smul.u32 16, %s27
        %s450 = smul.u32 16, %s27
        %p451 = scmp.lt.s32.totalorder %s450, 63
        %s452 = scalar_select %p451, %s450, 63
        %s453 = smul.addr %s452, 8
        %s454 = scalar_lea.vmem %s11, %s453
        %s455 = smul.u32 16, %s27
        %p456 = scmp.lt.s32.totalorder %s27, 3
        %s457 = scalar_select %p456, %s27, 3
        %s458 = scalar_lea.vmem %s12, %s457
        %v461 = vld [vmem:[%s441] sm:$0xff]
        %v462 = vld [vmem:[%s441 + $0x8] sm:$0xff]
        %v463 = vld [vmem:[%s441 + $0x10] sm:$0xff]
        %v464 = vld [vmem:[%s441 + $0x18] sm:$0xff]
        %v465 = vld [vmem:[%s441 + $0x20] sm:$0xff]
        %v466 = vld [vmem:[%s441 + $0x28] sm:$0xff]
        %v467 = vld [vmem:[%s441 + $0x30] sm:$0xff]
        %v468 = vld [vmem:[%s441 + $0x38] sm:$0xff]
        %v469 = vld [vmem:[%s441 + $0x40] sm:$0xff]
        %v470 = vld [vmem:[%s441 + $0x48] sm:$0xff]
        %v471 = vld [vmem:[%s441 + $0x50] sm:$0xff]
        %v472 = vld [vmem:[%s441 + $0x58] sm:$0xff]
        %v473 = vld [vmem:[%s441 + $0x60] sm:$0xff]
        %v474 = vld [vmem:[%s441 + $0x68] sm:$0xff]
        %v475 = vld [vmem:[%s441 + $0x70] sm:$0xff]
        %v476 = vld [vmem:[%s441 + $0x78] sm:$0xff]
        %v477 = vld [vmem:[%s447] sm:$0xff]
        %v478 = vld [vmem:[%s447 + $0x8] sm:$0xff]
        %v479 = vld [vmem:[%s447 + $0x10] sm:$0xff]
        %v480 = vld [vmem:[%s447 + $0x18] sm:$0xff]
        %v481 = vld [vmem:[%s447 + $0x20] sm:$0xff]
        %v482 = vld [vmem:[%s447 + $0x28] sm:$0xff]
        %v483 = vld [vmem:[%s447 + $0x30] sm:$0xff]
        %v484 = vld [vmem:[%s447 + $0x38] sm:$0xff]
        %v485 = vld [vmem:[%s447 + $0x40] sm:$0xff]
        %v486 = vld [vmem:[%s447 + $0x48] sm:$0xff]
        %v487 = vld [vmem:[%s447 + $0x50] sm:$0xff]
        %v488 = vld [vmem:[%s447 + $0x58] sm:$0xff]
        %v489 = vld [vmem:[%s447 + $0x60] sm:$0xff]
        %v490 = vld [vmem:[%s447 + $0x68] sm:$0xff]
        %v491 = vld [vmem:[%s447 + $0x70] sm:$0xff]
        %v492 = vld [vmem:[%s447 + $0x78] sm:$0xff]
        %v493 = vld [vmem:[%s7] sm:$0x3]
        %v494 = vld [vmem:[%s8] sm:$0x7]
        %v495 = vld [vmem:[%s9] sm:$0x7]
        %v496 = vpack.c.bf16 %v462, %v461
        %v497 = vpack.c.bf16 %v464, %v463
        %v498 = vpack.c.bf16 %v466, %v465
        %v499 = vpack.c.bf16 %v468, %v467
        %v500 = vpack.c.bf16 %v470, %v469
        %v501 = vpack.c.bf16 %v472, %v471
        %v502 = vpack.c.bf16 %v474, %v473
        %v503 = vpack.c.bf16 %v476, %v475
        %v504 = vld [vmem:[%s2] sm:$0xf]
        %v505 = vld [vmem:[%s2 + $0x4] sm:$0xf]
        %v506 = vld [vmem:[%s2 + $0x8] sm:$0xf]
        %v507 = vld [vmem:[%s2 + $0xc] sm:$0xf]
        %v508 = vld [vmem:[%s2 + $0x10] sm:$0xf]
        %v509 = vld [vmem:[%s2 + $0x14] sm:$0xf]
        %v510 = vld [vmem:[%s2 + $0x18] sm:$0xf]
        %v511 = vld [vmem:[%s2 + $0x1c] sm:$0xf]
        %v512 = vld [vmem:[%s2 + $0x20] sm:$0xf]
        %v513 = vld [vmem:[%s2 + $0x24] sm:$0xf]
        %v514 = vld [vmem:[%s2 + $0x28] sm:$0xf]
        %v515 = vld [vmem:[%s2 + $0x2c] sm:$0xf]
        %v516 = vld [vmem:[%s2 + $0x30] sm:$0xf]
        %v517 = vld [vmem:[%s2 + $0x34] sm:$0xf]
        %v518 = vld [vmem:[%s2 + $0x38] sm:$0xf]
        %v519 = vld [vmem:[%s2 + $0x3c] sm:$0xf]
        %v520 = vlaneseq
        %v521 = vshrl.u32 %v520, 7
        %v522 = vsub.s32 0, %v521
        %v523 = vrot.slane %v493, %v522
        %v540 = vunpack.c.l.b16 %v504
        %v541 = vunpack.c.l.b16 %v505
        %v542 = vunpack.c.l.b16 %v506
        %v543 = vunpack.c.l.b16 %v507
        %v544 = vunpack.c.l.b16 %v508
        %v545 = vunpack.c.l.b16 %v509
        %v546 = vunpack.c.l.b16 %v510
        %v547 = vunpack.c.l.b16 %v511
        %v548 = vunpack.c.l.b16 %v512
        %v549 = vunpack.c.l.b16 %v513
        %v550 = vunpack.c.l.b16 %v514
        %v551 = vunpack.c.l.b16 %v515
        %v552 = vunpack.c.l.b16 %v516
        %v553 = vunpack.c.l.b16 %v517
        %v554 = vunpack.c.l.b16 %v518
        %v555 = vunpack.c.l.b16 %v519
        %v556 = vpack.c.b16 %v541, %v540
        %v557 = vpack.c.b16 %v543, %v542
        %v558 = vpack.c.b16 %v545, %v544
        %v559 = vpack.c.b16 %v547, %v546
        %v560 = vpack.c.b16 %v549, %v548
        %v561 = vpack.c.b16 %v551, %v550
        %v562 = vpack.c.b16 %v553, %v552
        %v563 = vpack.c.b16 %v555, %v554
        %572 = vmatprep.subr.bf16.mxu0 0
        %573 = vmatpush1.bf16.msra.mxu0 %v556
        %574 = vmatprep.subr.bf16.mxu0 0
        %575 = vmatpush1.bf16.msra.mxu0 %v557
        %576 = vmatprep.subr.bf16.mxu0 0
        %577 = vmatpush1.bf16.msra.mxu0 %v558
        %578 = vmatprep.subr.bf16.mxu0 0
        %579 = vmatpush1.bf16.msra.mxu0 %v559
        %580 = vmatprep.subr.bf16.mxu0 0
        %581 = vmatpush1.bf16.msra.mxu0 %v560
        %582 = vmatprep.subr.bf16.mxu0 0
        %583 = vmatpush1.bf16.msra.mxu0 %v561
        %584 = vmatprep.subr.bf16.mxu0 0
        %585 = vmatpush1.bf16.msra.mxu0 %v562
        %586 = vmatprep.subr.bf16.mxu0 0
        %587 = vmatpush1.bf16.msra.mxu0 %v563
        %588 = vmatprep.subr.bf16.mxu0 0
        %589 = vmatpush1.bf16.msra.mxu0 0
        %590 = vmatprep.subr.bf16.mxu0 0
        %591 = vmatpush1.bf16.msra.mxu0 0
        %592 = vmatprep.subr.bf16.mxu0 0
        %593 = vmatpush1.bf16.msra.mxu0 0
        %594 = vmatprep.subr.bf16.mxu0 0
        %595 = vmatpush1.bf16.msra.mxu0 0
        %596 = vmatprep.subr.bf16.mxu0 0
        %597 = vmatpush1.bf16.msra.mxu0 0
        %598 = vmatprep.subr.bf16.mxu0 0
        %599 = vmatpush1.bf16.msra.mxu0 0
        %600 = vmatprep.subr.bf16.mxu0 0
        %601 = vmatpush1.bf16.msra.mxu0 0
        %602 = vmatprep.subr.bf16.mxu0 0
        %603 = vmatpush1.bf16.msra.mxu0 0
        %604 = vmatprep.mubr.bf16.mxu0 0
        %605 = vmatmul.mubr.bf16.gmra.mrb[0].mxu0 %v496
        %v606 = vpop.f32.mrb[0].mxu0
        %v607 = vadd.f32 %v523, %v606
        %v608 = vpop.f32.mrb[0].mxu0
        %v609 = vpop.f32.mrb[0].mxu0
        %v610 = vadd.f32 %v523, %v609
        %v611 = vpop.f32.mrb[0].mxu0
        %612 = vmatprep.mubr.bf16.mxu0 0
        %613 = vmatmul.mubr.bf16.gmra.mrb[0].mxu0 %v497
        %v614 = vpop.f32.mrb[0].mxu0
        %v615 = vadd.f32 %v523, %v614
        %v616 = vpop.f32.mrb[0].mxu0
        %v617 = vpop.f32.mrb[0].mxu0
        %v618 = vadd.f32 %v523, %v617
        %v619 = vpop.f32.mrb[0].mxu0
        %620 = vmatprep.mubr.bf16.mxu0 0
        %621 = vmatmul.mubr.bf16.gmra.mrb[0].mxu0 %v498
        %v622 = vpop.f32.mrb[0].mxu0
        %v623 = vadd.f32 %v523, %v622
        %v624 = vpop.f32.mrb[0].mxu0
        %v625 = vpop.f32.mrb[0].mxu0
        %v626 = vadd.f32 %v523, %v625
        %v627 = vpop.f32.mrb[0].mxu0
        %628 = vmatprep.mubr.bf16.mxu0 0
        %629 = vmatmul.mubr.bf16.gmra.mrb[0].mxu0 %v499
        %v630 = vpop.f32.mrb[0].mxu0
        %v631 = vadd.f32 %v523, %v630
        %v632 = vpop.f32.mrb[0].mxu0
        %v633 = vpop.f32.mrb[0].mxu0
        %v634 = vadd.f32 %v523, %v633
        %v635 = vpop.f32.mrb[0].mxu0
        %636 = vmatprep.mubr.bf16.mxu0 0
        %637 = vmatmul.mubr.bf16.gmra.mrb[0].mxu0 %v500
        %v638 = vpop.f32.mrb[0].mxu0
        %v639 = vadd.f32 %v523, %v638
        %v640 = vpop.f32.mrb[0].mxu0
        %v641 = vpop.f32.mrb[0].mxu0
        %v642 = vadd.f32 %v523, %v641
        %v643 = vpop.f32.mrb[0].mxu0
        %644 = vmatprep.mubr.bf16.mxu0 0
        %645 = vmatmul.mubr.bf16.gmra.mrb[0].mxu0 %v501
        %v646 = vpop.f32.mrb[0].mxu0
        %v647 = vadd.f32 %v523, %v646
        %v648 = vpop.f32.mrb[0].mxu0
        %v649 = vpop.f32.mrb[0].mxu0
        %v650 = vadd.f32 %v523, %v649
        %v651 = vpop.f32.mrb[0].mxu0
        %652 = vmatprep.mubr.bf16.mxu0 0
        %653 = vmatmul.mubr.bf16.gmra.mrb[0].mxu0 %v502
        %v654 = vpop.f32.mrb[0].mxu0
        %v655 = vadd.f32 %v523, %v654
        %v656 = vpop.f32.mrb[0].mxu0
        %v657 = vpop.f32.mrb[0].mxu0
        %v658 = vadd.f32 %v523, %v657
        %v659 = vpop.f32.mrb[0].mxu0
        %660 = vmatprep.mubr.bf16.mxu0 0
        %661 = vmatmul.mubr.bf16.gmra.mrb[0].mxu0 %v503
        %v662 = vpop.f32.mrb[0].mxu0
        %v663 = vadd.f32 %v523, %v662
        %v664 = vpop.f32.mrb[0].mxu0
        %v665 = vpop.f32.mrb[0].mxu0
        %v666 = vadd.f32 %v523, %v665
        %v667 = vpop.f32.mrb[0].mxu0
        %668 = vdwg.mxu0
        %v669 = vpack.c.bf16 %v610, %v607
        %v670 = vpack.c.bf16 %v618, %v615
        %v671 = vpack.c.bf16 %v626, %v623
        %v672 = vpack.c.bf16 %v634, %v631
        %v673 = vpack.c.bf16 %v642, %v639
        %v674 = vpack.c.bf16 %v650, %v647
        %v675 = vpack.c.bf16 %v658, %v655
        %v676 = vpack.c.bf16 %v666, %v663
        %v677 = vmax.bf16 %v669, 0
        %v678 = vmax.bf16 %v670, 0
        %v679 = vmax.bf16 %v671, 0
        %v680 = vmax.bf16 %v672, 0
        %v681 = vmax.bf16 %v673, 0
        %v682 = vmax.bf16 %v674, 0
        %v683 = vmax.bf16 %v675, 0
        %v684 = vmax.bf16 %v676, 0
        %v685 = vand.u32 2147450879, %v669
        %v686 = vand.u32 2147450879, %v670
        %v687 = vand.u32 2147450879, %v671
        %v688 = vand.u32 2147450879, %v672
        %v689 = vand.u32 2147450879, %v673
        %v690 = vand.u32 2147450879, %v674
        %v691 = vand.u32 2147450879, %v675
        %v692 = vand.u32 2147450879, %v676
        %v693 = vsub.bf16 0, %v685
        %v694 = vsub.bf16 0, %v686
        %v695 = vsub.bf16 0, %v687
        %v696 = vsub.bf16 0, %v688
        %v697 = vsub.bf16 0, %v689
        %v698 = vsub.bf16 0, %v690
        %v699 = vsub.bf16 0, %v691
        %v700 = vsub.bf16 0, %v692
        %v702 = vmul.bf16 %v693, 1069105081
        %v703 = vpow.bf16.pop %v702
        %v705 = vmul.bf16 %v694, 1069105081
        %v706 = vpow.bf16.pop %v705
        %v708 = vmul.bf16 %v695, 1069105081
        %v709 = vpow.bf16.pop %v708
        %v711 = vmul.bf16 %v696, 1069105081
        %v712 = vpow.bf16.pop %v711
        %v714 = vmul.bf16 %v697, 1069105081
        %v715 = vpow.bf16.pop %v714
        %v717 = vmul.bf16 %v698, 1069105081
        %v718 = vpow.bf16.pop %v717
        %v720 = vmul.bf16 %v699, 1069105081
        %v721 = vpow.bf16.pop %v720
        %v723 = vmul.bf16 %v700, 1069105081
        %v724 = vpow.bf16.pop %v723
        %v725 = vadd.bf16 %v703, 1065369472
        %v726 = vadd.bf16 %v706, 1065369472
        %v727 = vadd.bf16 %v709, 1065369472
        %v728 = vadd.bf16 %v712, 1065369472
        %v729 = vadd.bf16 %v715, 1065369472
        %v730 = vadd.bf16 %v718, 1065369472
        %v731 = vadd.bf16 %v721, 1065369472
        %v732 = vadd.bf16 %v724, 1065369472
        %v733 = vlog2.bf16.pop %v725
        %v735 = vmul.bf16 %v733, 1060192049
        %v736 = vlog2.bf16.pop %v726
        %v738 = vmul.bf16 %v736, 1060192049
        %v739 = vlog2.bf16.pop %v727
        %v741 = vmul.bf16 %v739, 1060192049
        %v742 = vlog2.bf16.pop %v728
        %v744 = vmul.bf16 %v742, 1060192049
        %v745 = vlog2.bf16.pop %v729
        %v747 = vmul.bf16 %v745, 1060192049
        %v748 = vlog2.bf16.pop %v730
        %v750 = vmul.bf16 %v748, 1060192049
        %v751 = vlog2.bf16.pop %v731
        %v753 = vmul.bf16 %v751, 1060192049
        %v754 = vlog2.bf16.pop %v732
        %v756 = vmul.bf16 %v754, 1060192049
        %v757 = vadd.bf16 %v677, %v735
        %v758 = vadd.bf16 %v678, %v738
        %v759 = vadd.bf16 %v679, %v741
        %v760 = vadd.bf16 %v680, %v744
        %v761 = vadd.bf16 %v681, %v747
        %v762 = vadd.bf16 %v682, %v750
        %v763 = vadd.bf16 %v683, %v753
        %v764 = vadd.bf16 %v684, %v756
        %v765 = vld [vmem:[%s3] sm:$0xf]
        %v766 = vld [vmem:[%s3 + $0x4] sm:$0xf]
        %v767 = vld [vmem:[%s3 + $0x8] sm:$0xf]
        %v768 = vld [vmem:[%s3 + $0xc] sm:$0xf]
        %v769 = vld [vmem:[%s3 + $0x10] sm:$0xf]
        %v770 = vld [vmem:[%s3 + $0x14] sm:$0xf]
        %v771 = vld [vmem:[%s3 + $0x18] sm:$0xf]
        %v772 = vld [vmem:[%s3 + $0x1c] sm:$0xf]
        %v773 = vlaneseq
        %v774 = vshrl.u32 %v773, 7
        %v775 = vsub.s32 1, %v774
        %v776 = vrot.slane %v493, %v775
        %v785 = vunpack.c.l.b16 %v765
        %v786 = vunpack.c.l.b16 %v766
        %v787 = vunpack.c.l.b16 %v767
        %v788 = vunpack.c.l.b16 %v768
        %v789 = vunpack.c.l.b16 %v769
        %v790 = vunpack.c.l.b16 %v770
        %v791 = vunpack.c.l.b16 %v771
        %v792 = vunpack.c.l.b16 %v772
        %v793 = vpack.c.b16 %v786, %v785
        %v794 = vpack.c.b16 %v788, %v787
        %v795 = vpack.c.b16 %v790, %v789
        %v796 = vpack.c.b16 %v792, %v791
        %vm801 = vcmask 523264
        %v803 = vsel %vm801, %v757, 0
        %v806 = vsel %vm801, %v758, 0
        %v809 = vsel %vm801, %v759, 0
        %v812 = vsel %vm801, %v760, 0
        %v815 = vsel %vm801, %v761, 0
        %v818 = vsel %vm801, %v762, 0
        %v821 = vsel %vm801, %v763, 0
        %v824 = vsel %vm801, %v764, 0
        %826 = vmatprep.subr.bf16.mxu0 0
        %827 = vmatpush1.bf16.msra.mxu0 %v793
        %828 = vmatprep.subr.bf16.mxu0 0
        %829 = vmatpush1.bf16.msra.mxu0 %v794
        %830 = vmatprep.subr.bf16.mxu0 0
        %831 = vmatpush1.bf16.msra.mxu0 %v795
        %832 = vmatprep.subr.bf16.mxu0 0
        %833 = vmatpush1.bf16.msra.mxu0 %v796
        %834 = vmatprep.subr.bf16.mxu0 0
        %835 = vmatpush1.bf16.msra.mxu0 0
        %836 = vmatprep.subr.bf16.mxu0 0
        %837 = vmatpush1.bf16.msra.mxu0 0
        %838 = vmatprep.subr.bf16.mxu0 0
        %839 = vmatpush1.bf16.msra.mxu0 0
        %840 = vmatprep.subr.bf16.mxu0 0
        %841 = vmatpush1.bf16.msra.mxu0 0
        %842 = vmatprep.subr.bf16.mxu0 0
        %843 = vmatpush1.bf16.msra.mxu0 0
        %844 = vmatprep.subr.bf16.mxu0 0
        %845 = vmatpush1.bf16.msra.mxu0 0
        %846 = vmatprep.subr.bf16.mxu0 0
        %847 = vmatpush1.bf16.msra.mxu0 0
        %848 = vmatprep.subr.bf16.mxu0 0
        %849 = vmatpush1.bf16.msra.mxu0 0
        %850 = vmatprep.subr.bf16.mxu0 0
        %851 = vmatpush1.bf16.msra.mxu0 0
        %852 = vmatprep.subr.bf16.mxu0 0
        %853 = vmatpush1.bf16.msra.mxu0 0
        %854 = vmatprep.subr.bf16.mxu0 0
        %855 = vmatpush1.bf16.msra.mxu0 0
        %856 = vmatprep.subr.bf16.mxu0 0
        %857 = vmatpush1.bf16.msra.mxu0 0
        %858 = vmatprep.mubr.bf16.mxu0 0
        %859 = vmatmul.mubr.bf16.gmra.mrb[0].mxu0 %v803
        %v860 = vpop.f32.mrb[0].mxu0
        %v861 = vadd.f32 %v776, %v860
        %v862 = vpop.f32.mrb[0].mxu0
        %v863 = vpop.f32.mrb[0].mxu0
        %v864 = vadd.f32 %v776, %v863
        %v865 = vpop.f32.mrb[0].mxu0
        %866 = vmatprep.mubr.bf16.mxu0 0
        %867 = vmatmul.mubr.bf16.gmra.mrb[0].mxu0 %v806
        %v868 = vpop.f32.mrb[0].mxu0
        %v869 = vadd.f32 %v776, %v868
        %v870 = vpop.f32.mrb[0].mxu0
        %v871 = vpop.f32.mrb[0].mxu0
        %v872 = vadd.f32 %v776, %v871
        %v873 = vpop.f32.mrb[0].mxu0
        %874 = vmatprep.mubr.bf16.mxu0 0
        %875 = vmatmul.mubr.bf16.gmra.mrb[0].mxu0 %v809
        %v876 = vpop.f32.mrb[0].mxu0
        %v877 = vadd.f32 %v776, %v876
        %v878 = vpop.f32.mrb[0].mxu0
        %v879 = vpop.f32.mrb[0].mxu0
        %v880 = vadd.f32 %v776, %v879
        %v881 = vpop.f32.mrb[0].mxu0
        %882 = vmatprep.mubr.bf16.mxu0 0
        %883 = vmatmul.mubr.bf16.gmra.mrb[0].mxu0 %v812
        %v884 = vpop.f32.mrb[0].mxu0
        %v885 = vadd.f32 %v776, %v884
        %v886 = vpop.f32.mrb[0].mxu0
        %v887 = vpop.f32.mrb[0].mxu0
        %v888 = vadd.f32 %v776, %v887
        %v889 = vpop.f32.mrb[0].mxu0
        %890 = vmatprep.mubr.bf16.mxu0 0
        %891 = vmatmul.mubr.bf16.gmra.mrb[0].mxu0 %v815
        %v892 = vpop.f32.mrb[0].mxu0
        %v893 = vadd.f32 %v776, %v892
        %v894 = vpop.f32.mrb[0].mxu0
        %v895 = vpop.f32.mrb[0].mxu0
        %v896 = vadd.f32 %v776, %v895
        %v897 = vpop.f32.mrb[0].mxu0
        %898 = vmatprep.mubr.bf16.mxu0 0
        %899 = vmatmul.mubr.bf16.gmra.mrb[0].mxu0 %v818
        %v900 = vpop.f32.mrb[0].mxu0
        %v901 = vadd.f32 %v776, %v900
        %v902 = vpop.f32.mrb[0].mxu0
        %v903 = vpop.f32.mrb[0].mxu0
        %v904 = vadd.f32 %v776, %v903
        %v905 = vpop.f32.mrb[0].mxu0
        %906 = vmatprep.mubr.bf16.mxu0 0
        %907 = vmatmul.mubr.bf16.gmra.mrb[0].mxu0 %v821
        %v908 = vpop.f32.mrb[0].mxu0
        %v909 = vadd.f32 %v776, %v908
        %v910 = vpop.f32.mrb[0].mxu0
        %v911 = vpop.f32.mrb[0].mxu0
        %v912 = vadd.f32 %v776, %v911
        %v913 = vpop.f32.mrb[0].mxu0
        %914 = vmatprep.mubr.bf16.mxu0 0
        %915 = vmatmul.mubr.bf16.gmra.mrb[0].mxu0 %v824
        %v916 = vpop.f32.mrb[0].mxu0
        %v917 = vadd.f32 %v776, %v916
        %v918 = vpop.f32.mrb[0].mxu0
        %v919 = vpop.f32.mrb[0].mxu0
        %v920 = vadd.f32 %v776, %v919
        %v921 = vpop.f32.mrb[0].mxu0
        %922 = vdwg.mxu0
        %v923 = vpack.c.bf16 %v864, %v861
        %v924 = vpack.c.bf16 %v872, %v869
        %v925 = vpack.c.bf16 %v880, %v877
        %v926 = vpack.c.bf16 %v888, %v885
        %v927 = vpack.c.bf16 %v896, %v893
        %v928 = vpack.c.bf16 %v904, %v901
        %v929 = vpack.c.bf16 %v912, %v909
        %v930 = vpack.c.bf16 %v920, %v917
        %v931 = vmax.bf16 %v923, 0
        %v932 = vmax.bf16 %v924, 0
        %v933 = vmax.bf16 %v925, 0
        %v934 = vmax.bf16 %v926, 0
        %v935 = vmax.bf16 %v927, 0
        %v936 = vmax.bf16 %v928, 0
        %v937 = vmax.bf16 %v929, 0
        %v938 = vmax.bf16 %v930, 0
        %v939 = vand.u32 2147450879, %v923
        %v940 = vand.u32 2147450879, %v924
        %v941 = vand.u32 2147450879, %v925
        %v942 = vand.u32 2147450879, %v926
        %v943 = vand.u32 2147450879, %v927
        %v944 = vand.u32 2147450879, %v928
        %v945 = vand.u32 2147450879, %v929
        %v946 = vand.u32 2147450879, %v930
        %v947 = vsub.bf16 0, %v939
        %v948 = vsub.bf16 0, %v940
        %v949 = vsub.bf16 0, %v941
        %v950 = vsub.bf16 0, %v942
        %v951 = vsub.bf16 0, %v943
        %v952 = vsub.bf16 0, %v944
        %v953 = vsub.bf16 0, %v945
        %v954 = vsub.bf16 0, %v946
        %v956 = vmul.bf16 %v947, 1069105081
        %v957 = vpow.bf16.pop %v956
        %v959 = vmul.bf16 %v948, 1069105081
        %v960 = vpow.bf16.pop %v959
        %v962 = vmul.bf16 %v949, 1069105081
        %v963 = vpow.bf16.pop %v962
        %v965 = vmul.bf16 %v950, 1069105081
        %v966 = vpow.bf16.pop %v965
        %v968 = vmul.bf16 %v951, 1069105081
        %v969 = vpow.bf16.pop %v968
        %v971 = vmul.bf16 %v952, 1069105081
        %v972 = vpow.bf16.pop %v971
        %v974 = vmul.bf16 %v953, 1069105081
        %v975 = vpow.bf16.pop %v974
        %v977 = vmul.bf16 %v954, 1069105081
        %v978 = vpow.bf16.pop %v977
        %v979 = vadd.bf16 %v957, 1065369472
        %v980 = vadd.bf16 %v960, 1065369472
        %v981 = vadd.bf16 %v963, 1065369472
        %v982 = vadd.bf16 %v966, 1065369472
        %v983 = vadd.bf16 %v969, 1065369472
        %v984 = vadd.bf16 %v972, 1065369472
        %v985 = vadd.bf16 %v975, 1065369472
        %v986 = vadd.bf16 %v978, 1065369472
        %v987 = vlog2.bf16.pop %v979
        %v989 = vmul.bf16 %v987, 1060192049
        %v990 = vlog2.bf16.pop %v980
        %v992 = vmul.bf16 %v990, 1060192049
        %v993 = vlog2.bf16.pop %v981
        %v995 = vmul.bf16 %v993, 1060192049
        %v996 = vlog2.bf16.pop %v982
        %v998 = vmul.bf16 %v996, 1060192049
        %v999 = vlog2.bf16.pop %v983
        %v1001 = vmul.bf16 %v999, 1060192049
        %v1002 = vlog2.bf16.pop %v984
        %v1004 = vmul.bf16 %v1002, 1060192049
        %v1005 = vlog2.bf16.pop %v985
        %v1007 = vmul.bf16 %v1005, 1060192049
        %v1008 = vlog2.bf16.pop %v986
        %v1010 = vmul.bf16 %v1008, 1060192049
        %v1011 = vadd.bf16 %v931, %v989
        %v1012 = vadd.bf16 %v932, %v992
        %v1013 = vadd.bf16 %v933, %v995
        %v1014 = vadd.bf16 %v934, %v998
        %v1015 = vadd.bf16 %v935, %v1001
        %v1016 = vadd.bf16 %v936, %v1004
        %v1017 = vadd.bf16 %v937, %v1007
        %v1018 = vadd.bf16 %v938, %v1010
        %v1019 = vld [vmem:[%s4] sm:$0xf]
        %v1020 = vld [vmem:[%s4 + $0x4] sm:$0xf]
        %v1021 = vld [vmem:[%s4 + $0x8] sm:$0xf]
        %v1022 = vld [vmem:[%s4 + $0xc] sm:$0xf]
        %v1023 = vld [vmem:[%s4 + $0x10] sm:$0xf]
        %v1024 = vld [vmem:[%s4 + $0x14] sm:$0xf]
        %v1025 = vld [vmem:[%s4 + $0x18] sm:$0xf]
        %v1026 = vld [vmem:[%s4 + $0x1c] sm:$0xf]
        %v1027 = vlaneseq
        %v1028 = vshrl.u32 %v1027, 7
        %v1029 = vsub.s32 0, %v1028
        %v1030 = vrot.slane %v494, %v1029
        %v1039 = vunpack.c.l.b16 %v1019
        %v1040 = vunpack.c.l.b16 %v1020
        %v1041 = vunpack.c.l.b16 %v1021
        %v1042 = vunpack.c.l.b16 %v1022
        %v1043 = vunpack.c.l.b16 %v1023
        %v1044 = vunpack.c.l.b16 %v1024
        %v1045 = vunpack.c.l.b16 %v1025
        %v1046 = vunpack.c.l.b16 %v1026
        %v1047 = vpack.c.b16 %v1040, %v1039
        %v1048 = vpack.c.b16 %v1042, %v1041
        %v1049 = vpack.c.b16 %v1044, %v1043
        %v1050 = vpack.c.b16 %v1046, %v1045
        %v1056 = vsel %vm801, %v1011, 0
        %v1059 = vsel %vm801, %v1012, 0
        %v1062 = vsel %vm801, %v1013, 0
        %v1065 = vsel %vm801, %v1014, 0
        %v1068 = vsel %vm801, %v1015, 0
        %v1071 = vsel %vm801, %v1016, 0
        %v1074 = vsel %vm801, %v1017, 0
        %v1077 = vsel %vm801, %v1018, 0
        %1079 = vmatprep.subr.bf16.mxu0 0
        %1080 = vmatpush1.bf16.msra.mxu0 %v1047
        %1081 = vmatprep.subr.bf16.mxu0 0
        %1082 = vmatpush1.bf16.msra.mxu0 %v1048
        %1083 = vmatprep.subr.bf16.mxu0 0
        %1084 = vmatpush1.bf16.msra.mxu0 %v1049
        %1085 = vmatprep.subr.bf16.mxu0 0
        %1086 = vmatpush1.bf16.msra.mxu0 %v1050
        %1087 = vmatprep.subr.bf16.mxu0 0
        %1088 = vmatpush1.bf16.msra.mxu0 0
        %1089 = vmatprep.subr.bf16.mxu0 0
        %1090 = vmatpush1.bf16.msra.mxu0 0
        %1091 = vmatprep.subr.bf16.mxu0 0
        %1092 = vmatpush1.bf16.msra.mxu0 0
        %1093 = vmatprep.subr.bf16.mxu0 0
        %1094 = vmatpush1.bf16.msra.mxu0 0
        %1095 = vmatprep.subr.bf16.mxu0 0
        %1096 = vmatpush1.bf16.msra.mxu0 0
        %1097 = vmatprep.subr.bf16.mxu0 0
        %1098 = vmatpush1.bf16.msra.mxu0 0
        %1099 = vmatprep.subr.bf16.mxu0 0
        %1100 = vmatpush1.bf16.msra.mxu0 0
        %1101 = vmatprep.subr.bf16.mxu0 0
        %1102 = vmatpush1.bf16.msra.mxu0 0
        %1103 = vmatprep.subr.bf16.mxu0 0
        %1104 = vmatpush1.bf16.msra.mxu0 0
        %1105 = vmatprep.subr.bf16.mxu0 0
        %1106 = vmatpush1.bf16.msra.mxu0 0
        %1107 = vmatprep.subr.bf16.mxu0 0
        %1108 = vmatpush1.bf16.msra.mxu0 0
        %1109 = vmatprep.subr.bf16.mxu0 0
        %1110 = vmatpush1.bf16.msra.mxu0 0
        %1111 = vmatprep.mubr.bf16.mxu0 0
        %1112 = vmatmul.mubr.bf16.gmra.mrb[0].mxu0 %v1056
        %v1113 = vpop.f32.mrb[0].mxu0
        %v1114 = vadd.f32 %v1030, %v1113
        %v1115 = vpop.f32.mrb[0].mxu0
        %v1116 = vpop.f32.mrb[0].mxu0
        %v1117 = vadd.f32 %v1030, %v1116
        %v1118 = vpop.f32.mrb[0].mxu0
        %1119 = vmatprep.mubr.bf16.mxu0 0
        %1120 = vmatmul.mubr.bf16.gmra.mrb[0].mxu0 %v1059
        %v1121 = vpop.f32.mrb[0].mxu0
        %v1122 = vadd.f32 %v1030, %v1121
        %v1123 = vpop.f32.mrb[0].mxu0
        %v1124 = vpop.f32.mrb[0].mxu0
        %v1125 = vadd.f32 %v1030, %v1124
        %v1126 = vpop.f32.mrb[0].mxu0
        %1127 = vmatprep.mubr.bf16.mxu0 0
        %1128 = vmatmul.mubr.bf16.gmra.mrb[0].mxu0 %v1062
        %v1129 = vpop.f32.mrb[0].mxu0
        %v1130 = vadd.f32 %v1030, %v1129
        %v1131 = vpop.f32.mrb[0].mxu0
        %v1132 = vpop.f32.mrb[0].mxu0
        %v1133 = vadd.f32 %v1030, %v1132
        %v1134 = vpop.f32.mrb[0].mxu0
        %1135 = vmatprep.mubr.bf16.mxu0 0
        %1136 = vmatmul.mubr.bf16.gmra.mrb[0].mxu0 %v1065
        %v1137 = vpop.f32.mrb[0].mxu0
        %v1138 = vadd.f32 %v1030, %v1137
        %v1139 = vpop.f32.mrb[0].mxu0
        %v1140 = vpop.f32.mrb[0].mxu0
        %v1141 = vadd.f32 %v1030, %v1140
        %v1142 = vpop.f32.mrb[0].mxu0
        %1143 = vmatprep.mubr.bf16.mxu0 0
        %1144 = vmatmul.mubr.bf16.gmra.mrb[0].mxu0 %v1068
        %v1145 = vpop.f32.mrb[0].mxu0
        %v1146 = vadd.f32 %v1030, %v1145
        %v1147 = vpop.f32.mrb[0].mxu0
        %v1148 = vpop.f32.mrb[0].mxu0
        %v1149 = vadd.f32 %v1030, %v1148
        %v1150 = vpop.f32.mrb[0].mxu0
        %1151 = vmatprep.mubr.bf16.mxu0 0
        %1152 = vmatmul.mubr.bf16.gmra.mrb[0].mxu0 %v1071
        %v1153 = vpop.f32.mrb[0].mxu0
        %v1154 = vadd.f32 %v1030, %v1153
        %v1155 = vpop.f32.mrb[0].mxu0
        %v1156 = vpop.f32.mrb[0].mxu0
        %v1157 = vadd.f32 %v1030, %v1156
        %v1158 = vpop.f32.mrb[0].mxu0
        %1159 = vmatprep.mubr.bf16.mxu0 0
        %1160 = vmatmul.mubr.bf16.gmra.mrb[0].mxu0 %v1074
        %v1161 = vpop.f32.mrb[0].mxu0
        %v1162 = vadd.f32 %v1030, %v1161
        %v1163 = vpop.f32.mrb[0].mxu0
        %v1164 = vpop.f32.mrb[0].mxu0
        %v1165 = vadd.f32 %v1030, %v1164
        %v1166 = vpop.f32.mrb[0].mxu0
        %1167 = vmatprep.mubr.bf16.mxu0 0
        %1168 = vmatmul.mubr.bf16.gmra.mrb[0].mxu0 %v1077
        %v1169 = vpop.f32.mrb[0].mxu0
        %v1170 = vadd.f32 %v1030, %v1169
        %v1171 = vpop.f32.mrb[0].mxu0
        %v1172 = vpop.f32.mrb[0].mxu0
        %v1173 = vadd.f32 %v1030, %v1172
        %v1174 = vpop.f32.mrb[0].mxu0
        %1175 = vdwg.mxu0
        %vm1176 = vcmask 261120
        %v1177 = vsel %vm1176, %v1114, 0.0
        %v1178 = vsel %vm1176, %v1117, 0.0
        %v1179 = vadd.f32 %v1177, %v1178
        %v1180 = vsel %vm1176, %v1122, 0.0
        %v1181 = vadd.f32 %v1179, %v1180
        %v1182 = vsel %vm1176, %v1125, 0.0
        %v1183 = vadd.f32 %v1181, %v1182
        %v1184 = vsel %vm1176, %v1130, 0.0
        %v1185 = vadd.f32 %v1183, %v1184
        %v1186 = vsel %vm1176, %v1133, 0.0
        %v1187 = vadd.f32 %v1185, %v1186
        %v1188 = vsel %vm1176, %v1138, 0.0
        %v1189 = vadd.f32 %v1187, %v1188
        %v1190 = vsel %vm1176, %v1141, 0.0
        %v1191 = vadd.f32 %v1189, %v1190
        %v1192 = vsel %vm1176, %v1146, 0.0
        %v1193 = vadd.f32 %v1191, %v1192
        %v1194 = vsel %vm1176, %v1149, 0.0
        %v1195 = vadd.f32 %v1193, %v1194
        %v1196 = vsel %vm1176, %v1154, 0.0
        %v1197 = vadd.f32 %v1195, %v1196
        %v1198 = vsel %vm1176, %v1157, 0.0
        %v1199 = vadd.f32 %v1197, %v1198
        %v1200 = vsel %vm1176, %v1162, 0.0
        %v1201 = vadd.f32 %v1199, %v1200
        %v1202 = vsel %vm1176, %v1165, 0.0
        %v1203 = vadd.f32 %v1201, %v1202
        %v1204 = vsel %vm1176, %v1170, 0.0
        %v1205 = vadd.f32 %v1203, %v1204
        %v1206 = vsel %vm1176, %v1173, 0.0
        %v1207 = vadd.f32 %v1205, %v1206
        %v1208 = vrot.slane %v1207, 4
        %v1209 = vadd.f32 %v1207, %v1208
        %v1210 = vrot.slane %v1209, 2
        %v1211 = vadd.f32 %v1209, %v1210
        %v1212 = vrot.slane %v1211, 1
        %v1213 = vadd.f32 %v1211, %v1212
        %v1214 = vrcp.pop 128.0
        %v1215 = vmul.f32 %v1213, %v1214
        %v1216 = vsub.f32 %v1114, %v1215
        %v1217 = vsub.f32 %v1117, %v1215
        %v1218 = vsub.f32 %v1122, %v1215
        %v1219 = vsub.f32 %v1125, %v1215
        %v1220 = vsub.f32 %v1130, %v1215
        %v1221 = vsub.f32 %v1133, %v1215
        %v1222 = vsub.f32 %v1138, %v1215
        %v1223 = vsub.f32 %v1141, %v1215
        %v1224 = vsub.f32 %v1146, %v1215
        %v1225 = vsub.f32 %v1149, %v1215
        %v1226 = vsub.f32 %v1154, %v1215
        %v1227 = vsub.f32 %v1157, %v1215
        %v1228 = vsub.f32 %v1162, %v1215
        %v1229 = vsub.f32 %v1165, %v1215
        %v1230 = vsub.f32 %v1170, %v1215
        %v1231 = vsub.f32 %v1173, %v1215
        %v1232 = vmul.f32 %v1216, %v1216
        %v1233 = vmul.f32 %v1217, %v1217
        %v1234 = vmul.f32 %v1218, %v1218
        %v1235 = vmul.f32 %v1219, %v1219
        %v1236 = vmul.f32 %v1220, %v1220
        %v1237 = vmul.f32 %v1221, %v1221
        %v1238 = vmul.f32 %v1222, %v1222
        %v1239 = vmul.f32 %v1223, %v1223
        %v1240 = vmul.f32 %v1224, %v1224
        %v1241 = vmul.f32 %v1225, %v1225
        %v1242 = vmul.f32 %v1226, %v1226
        %v1243 = vmul.f32 %v1227, %v1227
        %v1244 = vmul.f32 %v1228, %v1228
        %v1245 = vmul.f32 %v1229, %v1229
        %v1246 = vmul.f32 %v1230, %v1230
        %v1247 = vmul.f32 %v1231, %v1231
        %v1248 = vsel %vm1176, %v1232, 0.0
        %v1249 = vsel %vm1176, %v1233, 0.0
        %v1250 = vadd.f32 %v1248, %v1249
        %v1251 = vsel %vm1176, %v1234, 0.0
        %v1252 = vadd.f32 %v1250, %v1251
        %v1253 = vsel %vm1176, %v1235, 0.0
        %v1254 = vadd.f32 %v1252, %v1253
        %v1255 = vsel %vm1176, %v1236, 0.0
        %v1256 = vadd.f32 %v1254, %v1255
        %v1257 = vsel %vm1176, %v1237, 0.0
        %v1258 = vadd.f32 %v1256, %v1257
        %v1259 = vsel %vm1176, %v1238, 0.0
        %v1260 = vadd.f32 %v1258, %v1259
        %v1261 = vsel %vm1176, %v1239, 0.0
        %v1262 = vadd.f32 %v1260, %v1261
        %v1263 = vsel %vm1176, %v1240, 0.0
        %v1264 = vadd.f32 %v1262, %v1263
        %v1265 = vsel %vm1176, %v1241, 0.0
        %v1266 = vadd.f32 %v1264, %v1265
        %v1267 = vsel %vm1176, %v1242, 0.0
        %v1268 = vadd.f32 %v1266, %v1267
        %v1269 = vsel %vm1176, %v1243, 0.0
        %v1270 = vadd.f32 %v1268, %v1269
        %v1271 = vsel %vm1176, %v1244, 0.0
        %v1272 = vadd.f32 %v1270, %v1271
        %v1273 = vsel %vm1176, %v1245, 0.0
        %v1274 = vadd.f32 %v1272, %v1273
        %v1275 = vsel %vm1176, %v1246, 0.0
        %v1276 = vadd.f32 %v1274, %v1275
        %v1277 = vsel %vm1176, %v1247, 0.0
        %v1278 = vadd.f32 %v1276, %v1277
        %v1279 = vrot.slane %v1278, 4
        %v1280 = vadd.f32 %v1278, %v1279
        %v1281 = vrot.slane %v1280, 2
        %v1282 = vadd.f32 %v1280, %v1281
        %v1283 = vrot.slane %v1282, 1
        %v1284 = vadd.f32 %v1282, %v1283
        %v1285 = vmul.f32 %v1284, %v1214
        %v1286 = vadd.f32 %v1285, 1e-05
        %v1287 = vrsqrt.pop %v1286
        %v1288 = vmul.f32 %v1216, %v1287
        %v1289 = vmul.f32 %v1217, %v1287
        %v1290 = vmul.f32 %v1218, %v1287
        %v1291 = vmul.f32 %v1219, %v1287
        %v1292 = vmul.f32 %v1220, %v1287
        %v1293 = vmul.f32 %v1221, %v1287
        %v1294 = vmul.f32 %v1222, %v1287
        %v1295 = vmul.f32 %v1223, %v1287
        %v1296 = vmul.f32 %v1224, %v1287
        %v1297 = vmul.f32 %v1225, %v1287
        %v1298 = vmul.f32 %v1226, %v1287
        %v1299 = vmul.f32 %v1227, %v1287
        %v1300 = vmul.f32 %v1228, %v1287
        %v1301 = vmul.f32 %v1229, %v1287
        %v1302 = vmul.f32 %v1230, %v1287
        %v1303 = vmul.f32 %v1231, %v1287
        %v1304 = vlaneseq
        %v1305 = vshrl.u32 %v1304, 7
        %v1306 = vsub.s32 1, %v1305
        %v1307 = vrot.slane %v494, %v1306
        %v1308 = vmul.f32 %v1288, %v1307
        %v1309 = vmul.f32 %v1289, %v1307
        %v1310 = vmul.f32 %v1290, %v1307
        %v1311 = vmul.f32 %v1291, %v1307
        %v1312 = vmul.f32 %v1292, %v1307
        %v1313 = vmul.f32 %v1293, %v1307
        %v1314 = vmul.f32 %v1294, %v1307
        %v1315 = vmul.f32 %v1295, %v1307
        %v1316 = vmul.f32 %v1296, %v1307
        %v1317 = vmul.f32 %v1297, %v1307
        %v1318 = vmul.f32 %v1298, %v1307
        %v1319 = vmul.f32 %v1299, %v1307
        %v1320 = vmul.f32 %v1300, %v1307
        %v1321 = vmul.f32 %v1301, %v1307
        %v1322 = vmul.f32 %v1302, %v1307
        %v1323 = vmul.f32 %v1303, %v1307
        %v1324 = vlaneseq
        %v1325 = vshrl.u32 %v1324, 7
        %v1326 = vsub.s32 2, %v1325
        %v1327 = vrot.slane %v494, %v1326
        %v1328 = vadd.f32 %v1308, %v1327
        %v1329 = vadd.f32 %v1309, %v1327
        %v1330 = vadd.f32 %v1310, %v1327
        %v1331 = vadd.f32 %v1311, %v1327
        %v1332 = vadd.f32 %v1312, %v1327
        %v1333 = vadd.f32 %v1313, %v1327
        %v1334 = vadd.f32 %v1314, %v1327
        %v1335 = vadd.f32 %v1315, %v1327
        %v1336 = vadd.f32 %v1316, %v1327
        %v1337 = vadd.f32 %v1317, %v1327
        %v1338 = vadd.f32 %v1318, %v1327
        %v1339 = vadd.f32 %v1319, %v1327
        %v1340 = vadd.f32 %v1320, %v1327
        %v1341 = vadd.f32 %v1321, %v1327
        %v1342 = vadd.f32 %v1322, %v1327
        %v1343 = vadd.f32 %v1323, %v1327
        %v1344 = vmul.f32 %v1328, 0.5
        %v1345 = vmul.f32 %v1329, 0.5
        %v1346 = vmul.f32 %v1330, 0.5
        %v1347 = vmul.f32 %v1331, 0.5
        %v1348 = vmul.f32 %v1332, 0.5
        %v1349 = vmul.f32 %v1333, 0.5
        %v1350 = vmul.f32 %v1334, 0.5
        %v1351 = vmul.f32 %v1335, 0.5
        %v1352 = vmul.f32 %v1336, 0.5
        %v1353 = vmul.f32 %v1337, 0.5
        %v1354 = vmul.f32 %v1338, 0.5
        %v1355 = vmul.f32 %v1339, 0.5
        %v1356 = vmul.f32 %v1340, 0.5
        %v1357 = vmul.f32 %v1341, 0.5
        %v1358 = vmul.f32 %v1342, 0.5
        %v1359 = vmul.f32 %v1343, 0.5
        %v1360 = vmul.f32 %v1344, 1.442695
        %v1361 = vpow.pop %v1360
        %v1362 = vmul.f32 %v1345, 1.442695
        %v1363 = vpow.pop %v1362
        %v1364 = vmul.f32 %v1346, 1.442695
        %v1365 = vpow.pop %v1364
        %v1366 = vmul.f32 %v1347, 1.442695
        %v1367 = vpow.pop %v1366
        %v1368 = vmul.f32 %v1348, 1.442695
        %v1369 = vpow.pop %v1368
        %v1370 = vmul.f32 %v1349, 1.442695
        %v1371 = vpow.pop %v1370
        %v1372 = vmul.f32 %v1350, 1.442695
        %v1373 = vpow.pop %v1372
        %v1374 = vmul.f32 %v1351, 1.442695
        %v1375 = vpow.pop %v1374
        %v1376 = vmul.f32 %v1352, 1.442695
        %v1377 = vpow.pop %v1376
        %v1378 = vmul.f32 %v1353, 1.442695
        %v1379 = vpow.pop %v1378
        %v1380 = vmul.f32 %v1354, 1.442695
        %v1381 = vpow.pop %v1380
        %v1382 = vmul.f32 %v1355, 1.442695
        %v1383 = vpow.pop %v1382
        %v1384 = vmul.f32 %v1356, 1.442695
        %v1385 = vpow.pop %v1384
        %v1386 = vmul.f32 %v1357, 1.442695
        %v1387 = vpow.pop %v1386
        %v1388 = vmul.f32 %v1358, 1.442695
        %v1389 = vpow.pop %v1388
        %v1390 = vmul.f32 %v1359, 1.442695
        %v1391 = vpow.pop %v1390
        %v1392 = vmul.f32 %v1361, %v1361
        %v1393 = vmul.f32 %v1363, %v1363
        %v1394 = vmul.f32 %v1365, %v1365
        %v1395 = vmul.f32 %v1367, %v1367
        %v1396 = vmul.f32 %v1369, %v1369
        %v1397 = vmul.f32 %v1371, %v1371
        %v1398 = vmul.f32 %v1373, %v1373
        %v1399 = vmul.f32 %v1375, %v1375
        %v1400 = vmul.f32 %v1377, %v1377
        %v1401 = vmul.f32 %v1379, %v1379
        %v1402 = vmul.f32 %v1381, %v1381
        %v1403 = vmul.f32 %v1383, %v1383
        %v1404 = vmul.f32 %v1385, %v1385
        %v1405 = vmul.f32 %v1387, %v1387
        %v1406 = vmul.f32 %v1389, %v1389
        %v1407 = vmul.f32 %v1391, %v1391
        %1424 = vrot.lane.b32.xlu0 %v477, 16
        %v1425 = vpop.permute.xlu0 %1424
        %1426 = vrot.lane.b32.xlu0 %v478, 16
        %v1427 = vpop.permute.xlu0 %1426
        %1428 = vrot.lane.b32.xlu0 %v479, 16
        %v1429 = vpop.permute.xlu0 %1428
        %1430 = vrot.lane.b32.xlu0 %v480, 16
        %v1431 = vpop.permute.xlu0 %1430
        %1432 = vrot.lane.b32.xlu0 %v481, 16
        %v1433 = vpop.permute.xlu0 %1432
        %1434 = vrot.lane.b32.xlu0 %v482, 16
        %v1435 = vpop.permute.xlu0 %1434
        %1436 = vrot.lane.b32.xlu0 %v483, 16
        %v1437 = vpop.permute.xlu0 %1436
        %1438 = vrot.lane.b32.xlu0 %v484, 16
        %v1439 = vpop.permute.xlu0 %1438
        %1440 = vrot.lane.b32.xlu0 %v485, 16
        %v1441 = vpop.permute.xlu0 %1440
        %1442 = vrot.lane.b32.xlu0 %v486, 16
        %v1443 = vpop.permute.xlu0 %1442
        %1444 = vrot.lane.b32.xlu0 %v487, 16
        %v1445 = vpop.permute.xlu0 %1444
        %1446 = vrot.lane.b32.xlu0 %v488, 16
        %v1447 = vpop.permute.xlu0 %1446
        %1448 = vrot.lane.b32.xlu0 %v489, 16
        %v1449 = vpop.permute.xlu0 %1448
        %1450 = vrot.lane.b32.xlu0 %v490, 16
        %v1451 = vpop.permute.xlu0 %1450
        %1452 = vrot.lane.b32.xlu0 %v491, 16
        %v1453 = vpop.permute.xlu0 %1452
        %1454 = vrot.lane.b32.xlu0 %v492, 16
        %v1455 = vpop.permute.xlu0 %1454
        %v1472 = vmul.f32 %v1361, %v1425
        %v1473 = vmul.f32 %v1363, %v1427
        %v1474 = vmul.f32 %v1365, %v1429
        %v1475 = vmul.f32 %v1367, %v1431
        %v1476 = vmul.f32 %v1369, %v1433
        %v1477 = vmul.f32 %v1371, %v1435
        %v1478 = vmul.f32 %v1373, %v1437
        %v1479 = vmul.f32 %v1375, %v1439
        %v1480 = vmul.f32 %v1377, %v1441
        %v1481 = vmul.f32 %v1379, %v1443
        %v1482 = vmul.f32 %v1381, %v1445
        %v1483 = vmul.f32 %v1383, %v1447
        %v1484 = vmul.f32 %v1385, %v1449
        %v1485 = vmul.f32 %v1387, %v1451
        %v1486 = vmul.f32 %v1389, %v1453
        %v1487 = vmul.f32 %v1391, %v1455
        %1504 = vrot.lane.b32.xlu0 %v1472, 112
        %v1505 = vpop.permute.xlu0 %1504
        %1506 = vrot.lane.b32.xlu0 %v1473, 112
        %v1507 = vpop.permute.xlu0 %1506
        %1508 = vrot.lane.b32.xlu0 %v1474, 112
        %v1509 = vpop.permute.xlu0 %1508
        %1510 = vrot.lane.b32.xlu0 %v1475, 112
        %v1511 = vpop.permute.xlu0 %1510
        %1512 = vrot.lane.b32.xlu0 %v1476, 112
        %v1513 = vpop.permute.xlu0 %1512
        %1514 = vrot.lane.b32.xlu0 %v1477, 112
        %v1515 = vpop.permute.xlu0 %1514
        %1516 = vrot.lane.b32.xlu0 %v1478, 112
        %v1517 = vpop.permute.xlu0 %1516
        %1518 = vrot.lane.b32.xlu0 %v1479, 112
        %v1519 = vpop.permute.xlu0 %1518
        %1520 = vrot.lane.b32.xlu0 %v1480, 112
        %v1521 = vpop.permute.xlu0 %1520
        %1522 = vrot.lane.b32.xlu0 %v1481, 112
        %v1523 = vpop.permute.xlu0 %1522
        %1524 = vrot.lane.b32.xlu0 %v1482, 112
        %v1525 = vpop.permute.xlu0 %1524
        %1526 = vrot.lane.b32.xlu0 %v1483, 112
        %v1527 = vpop.permute.xlu0 %1526
        %1528 = vrot.lane.b32.xlu0 %v1484, 112
        %v1529 = vpop.permute.xlu0 %1528
        %1530 = vrot.lane.b32.xlu0 %v1485, 112
        %v1531 = vpop.permute.xlu0 %1530
        %1532 = vrot.lane.b32.xlu0 %v1486, 112
        %v1533 = vpop.permute.xlu0 %1532
        %1534 = vrot.lane.b32.xlu0 %v1487, 112
        %v1535 = vpop.permute.xlu0 %1534
        %v1552 = vadd.f32 %v1328, %v1505
        %v1553 = vadd.f32 %v1329, %v1507
        %v1554 = vadd.f32 %v1330, %v1509
        %v1555 = vadd.f32 %v1331, %v1511
        %v1556 = vadd.f32 %v1332, %v1513
        %v1557 = vadd.f32 %v1333, %v1515
        %v1558 = vadd.f32 %v1334, %v1517
        %v1559 = vadd.f32 %v1335, %v1519
        %v1560 = vadd.f32 %v1336, %v1521
        %v1561 = vadd.f32 %v1337, %v1523
        %v1562 = vadd.f32 %v1338, %v1525
        %v1563 = vadd.f32 %v1339, %v1527
        %v1564 = vadd.f32 %v1340, %v1529
        %v1565 = vadd.f32 %v1341, %v1531
        %v1566 = vadd.f32 %v1342, %v1533
        %v1567 = vadd.f32 %v1343, %v1535
        %vm1568 = vcmask 130048
        %v1569 = vsel %vm1568, %v1552, -inf
        %1570 = vmax.xlane.f32.xlu0 %v1569
        %v1571 = vpop.xlane.xlu0 %1570
        %v1572 = vsel %vm1568, %v1553, -inf
        %1573 = vmax.xlane.f32.xlu0 %v1572
        %v1574 = vpop.xlane.xlu0 %1573
        %v1575 = vsel %vm1568, %v1554, -inf
        %1576 = vmax.xlane.f32.xlu0 %v1575
        %v1577 = vpop.xlane.xlu0 %1576
        %v1578 = vsel %vm1568, %v1555, -inf
        %1579 = vmax.xlane.f32.xlu0 %v1578
        %v1580 = vpop.xlane.xlu0 %1579
        %v1581 = vsel %vm1568, %v1556, -inf
        %1582 = vmax.xlane.f32.xlu0 %v1581
        %v1583 = vpop.xlane.xlu0 %1582
        %v1584 = vsel %vm1568, %v1557, -inf
        %1585 = vmax.xlane.f32.xlu0 %v1584
        %v1586 = vpop.xlane.xlu0 %1585
        %v1587 = vsel %vm1568, %v1558, -inf
        %1588 = vmax.xlane.f32.xlu0 %v1587
        %v1589 = vpop.xlane.xlu0 %1588
        %v1590 = vsel %vm1568, %v1559, -inf
        %1591 = vmax.xlane.f32.xlu0 %v1590
        %v1592 = vpop.xlane.xlu0 %1591
        %v1593 = vsel %vm1568, %v1560, -inf
        %1594 = vmax.xlane.f32.xlu0 %v1593
        %v1595 = vpop.xlane.xlu0 %1594
        %v1596 = vsel %vm1568, %v1561, -inf
        %1597 = vmax.xlane.f32.xlu0 %v1596
        %v1598 = vpop.xlane.xlu0 %1597
        %v1599 = vsel %vm1568, %v1562, -inf
        %1600 = vmax.xlane.f32.xlu0 %v1599
        %v1601 = vpop.xlane.xlu0 %1600
        %v1602 = vsel %vm1568, %v1563, -inf
        %1603 = vmax.xlane.f32.xlu0 %v1602
        %v1604 = vpop.xlane.xlu0 %1603
        %v1605 = vsel %vm1568, %v1564, -inf
        %1606 = vmax.xlane.f32.xlu0 %v1605
        %v1607 = vpop.xlane.xlu0 %1606
        %v1608 = vsel %vm1568, %v1565, -inf
        %1609 = vmax.xlane.f32.xlu0 %v1608
        %v1610 = vpop.xlane.xlu0 %1609
        %v1611 = vsel %vm1568, %v1566, -inf
        %1612 = vmax.xlane.f32.xlu0 %v1611
        %v1613 = vpop.xlane.xlu0 %1612
        %v1614 = vsel %vm1568, %v1567, -inf
        %1615 = vmax.xlane.f32.xlu0 %v1614
        %v1616 = vpop.xlane.xlu0 %1615
        %v1617 = vsub.f32 %v1552, %v1571
        %v1618 = vsub.f32 %v1553, %v1574
        %v1619 = vsub.f32 %v1554, %v1577
        %v1620 = vsub.f32 %v1555, %v1580
        %v1621 = vsub.f32 %v1556, %v1583
        %v1622 = vsub.f32 %v1557, %v1586
        %v1623 = vsub.f32 %v1558, %v1589
        %v1624 = vsub.f32 %v1559, %v1592
        %v1625 = vsub.f32 %v1560, %v1595
        %v1626 = vsub.f32 %v1561, %v1598
        %v1627 = vsub.f32 %v1562, %v1601
        %v1628 = vsub.f32 %v1563, %v1604
        %v1629 = vsub.f32 %v1564, %v1607
        %v1630 = vsub.f32 %v1565, %v1610
        %v1631 = vsub.f32 %v1566, %v1613
        %v1632 = vsub.f32 %v1567, %v1616
        %v1633 = vmul.f32 %v1617, 1.442695
        %v1634 = vpow.pop %v1633
        %v1635 = vmul.f32 %v1618, 1.442695
        %v1636 = vpow.pop %v1635
        %v1637 = vmul.f32 %v1619, 1.442695
        %v1638 = vpow.pop %v1637
        %v1639 = vmul.f32 %v1620, 1.442695
        %v1640 = vpow.pop %v1639
        %v1641 = vmul.f32 %v1621, 1.442695
        %v1642 = vpow.pop %v1641
        %v1643 = vmul.f32 %v1622, 1.442695
        %v1644 = vpow.pop %v1643
        %v1645 = vmul.f32 %v1623, 1.442695
        %v1646 = vpow.pop %v1645
        %v1647 = vmul.f32 %v1624, 1.442695
        %v1648 = vpow.pop %v1647
        %v1649 = vmul.f32 %v1625, 1.442695
        %v1650 = vpow.pop %v1649
        %v1651 = vmul.f32 %v1626, 1.442695
        %v1652 = vpow.pop %v1651
        %v1653 = vmul.f32 %v1627, 1.442695
        %v1654 = vpow.pop %v1653
        %v1655 = vmul.f32 %v1628, 1.442695
        %v1656 = vpow.pop %v1655
        %v1657 = vmul.f32 %v1629, 1.442695
        %v1658 = vpow.pop %v1657
        %v1659 = vmul.f32 %v1630, 1.442695
        %v1660 = vpow.pop %v1659
        %v1661 = vmul.f32 %v1631, 1.442695
        %v1662 = vpow.pop %v1661
        %v1663 = vmul.f32 %v1632, 1.442695
        %v1664 = vpow.pop %v1663
        %v1665 = vsel %vm1568, %v1634, 0.0
        %1666 = vadd.xlane.f32.xlu0 %v1665
        %v1667 = vpop.xlane.xlu0 %1666
        %v1668 = vsel %vm1568, %v1636, 0.0
        %1669 = vadd.xlane.f32.xlu0 %v1668
        %v1670 = vpop.xlane.xlu0 %1669
        %v1671 = vsel %vm1568, %v1638, 0.0
        %1672 = vadd.xlane.f32.xlu0 %v1671
        %v1673 = vpop.xlane.xlu0 %1672
        %v1674 = vsel %vm1568, %v1640, 0.0
        %1675 = vadd.xlane.f32.xlu0 %v1674
        %v1676 = vpop.xlane.xlu0 %1675
        %v1677 = vsel %vm1568, %v1642, 0.0
        %1678 = vadd.xlane.f32.xlu0 %v1677
        %v1679 = vpop.xlane.xlu0 %1678
        %v1680 = vsel %vm1568, %v1644, 0.0
        %1681 = vadd.xlane.f32.xlu0 %v1680
        %v1682 = vpop.xlane.xlu0 %1681
        %v1683 = vsel %vm1568, %v1646, 0.0
        %1684 = vadd.xlane.f32.xlu0 %v1683
        %v1685 = vpop.xlane.xlu0 %1684
        %v1686 = vsel %vm1568, %v1648, 0.0
        %1687 = vadd.xlane.f32.xlu0 %v1686
        %v1688 = vpop.xlane.xlu0 %1687
        %v1689 = vsel %vm1568, %v1650, 0.0
        %1690 = vadd.xlane.f32.xlu0 %v1689
        %v1691 = vpop.xlane.xlu0 %1690
        %v1692 = vsel %vm1568, %v1652, 0.0
        %1693 = vadd.xlane.f32.xlu0 %v1692
        %v1694 = vpop.xlane.xlu0 %1693
        %v1695 = vsel %vm1568, %v1654, 0.0
        %1696 = vadd.xlane.f32.xlu0 %v1695
        %v1697 = vpop.xlane.xlu0 %1696
        %v1698 = vsel %vm1568, %v1656, 0.0
        %1699 = vadd.xlane.f32.xlu0 %v1698
        %v1700 = vpop.xlane.xlu0 %1699
        %v1701 = vsel %vm1568, %v1658, 0.0
        %1702 = vadd.xlane.f32.xlu0 %v1701
        %v1703 = vpop.xlane.xlu0 %1702
        %v1704 = vsel %vm1568, %v1660, 0.0
        %1705 = vadd.xlane.f32.xlu0 %v1704
        %v1706 = vpop.xlane.xlu0 %1705
        %v1707 = vsel %vm1568, %v1662, 0.0
        %1708 = vadd.xlane.f32.xlu0 %v1707
        %v1709 = vpop.xlane.xlu0 %1708
        %v1710 = vsel %vm1568, %v1664, 0.0
        %1711 = vadd.xlane.f32.xlu0 %v1710
        %v1712 = vpop.xlane.xlu0 %1711
        %v1713 = vrcp.pop %v1667
        %v1714 = vmul.f32 %v1634, %v1713
        %v1715 = vrcp.pop %v1670
        %v1716 = vmul.f32 %v1636, %v1715
        %v1717 = vrcp.pop %v1673
        %v1718 = vmul.f32 %v1638, %v1717
        %v1719 = vrcp.pop %v1676
        %v1720 = vmul.f32 %v1640, %v1719
        %v1721 = vrcp.pop %v1679
        %v1722 = vmul.f32 %v1642, %v1721
        %v1723 = vrcp.pop %v1682
        %v1724 = vmul.f32 %v1644, %v1723
        %v1725 = vrcp.pop %v1685
        %v1726 = vmul.f32 %v1646, %v1725
        %v1727 = vrcp.pop %v1688
        %v1728 = vmul.f32 %v1648, %v1727
        %v1729 = vrcp.pop %v1691
        %v1730 = vmul.f32 %v1650, %v1729
        %v1731 = vrcp.pop %v1694
        %v1732 = vmul.f32 %v1652, %v1731
        %v1733 = vrcp.pop %v1697
        %v1734 = vmul.f32 %v1654, %v1733
        %v1735 = vrcp.pop %v1700
        %v1736 = vmul.f32 %v1656, %v1735
        %v1737 = vrcp.pop %v1703
        %v1738 = vmul.f32 %v1658, %v1737
        %v1739 = vrcp.pop %v1706
        %v1740 = vmul.f32 %v1660, %v1739
        %v1741 = vrcp.pop %v1709
        %v1742 = vmul.f32 %v1662, %v1741
        %v1743 = vrcp.pop %v1712
        %v1744 = vmul.f32 %v1664, %v1743
        %v1745 = vpack.c.bf16 %v1716, %v1714
        %v1746 = vpack.c.bf16 %v1720, %v1718
        %v1747 = vpack.c.bf16 %v1724, %v1722
        %v1748 = vpack.c.bf16 %v1728, %v1726
        %v1749 = vpack.c.bf16 %v1732, %v1730
        %v1750 = vpack.c.bf16 %v1736, %v1734
        %v1751 = vpack.c.bf16 %v1740, %v1738
        %v1752 = vpack.c.bf16 %v1744, %v1742
        %v1753 = vld [vmem:[%s5] sm:$0xf]
        %v1754 = vld [vmem:[%s5 + $0x4] sm:$0xf]
        %v1757 = vunpack.c.l.b16 %v1753
        %v1758 = vunpack.c.l.b16 %v1754
        %v1759 = vpack.c.b16 %v1758, %v1757
        %v1762 = vsel %vm1568, %v1745, 0
        %v1765 = vsel %vm1568, %v1746, 0
        %v1768 = vsel %vm1568, %v1747, 0
        %v1771 = vsel %vm1568, %v1748, 0
        %v1774 = vsel %vm1568, %v1749, 0
        %v1777 = vsel %vm1568, %v1750, 0
        %v1780 = vsel %vm1568, %v1751, 0
        %v1783 = vsel %vm1568, %v1752, 0
        %1785 = vmatprep.subr.bf16.mxu0 0
        %1786 = vmatpush1.bf16.msra.mxu0 %v1759
        %1787 = vmatprep.subr.bf16.mxu0 0
        %1788 = vmatpush1.bf16.msra.mxu0 0
        %1789 = vmatprep.subr.bf16.mxu0 0
        %1790 = vmatpush1.bf16.msra.mxu0 0
        %1791 = vmatprep.subr.bf16.mxu0 0
        %1792 = vmatpush1.bf16.msra.mxu0 0
        %1793 = vmatprep.subr.bf16.mxu0 0
        %1794 = vmatpush1.bf16.msra.mxu0 0
        %1795 = vmatprep.subr.bf16.mxu0 0
        %1796 = vmatpush1.bf16.msra.mxu0 0
        %1797 = vmatprep.subr.bf16.mxu0 0
        %1798 = vmatpush1.bf16.msra.mxu0 0
        %1799 = vmatprep.subr.bf16.mxu0 0
        %1800 = vmatpush1.bf16.msra.mxu0 0
        %1801 = vmatprep.subr.bf16.mxu0 0
        %1802 = vmatpush1.bf16.msra.mxu0 0
        %1803 = vmatprep.subr.bf16.mxu0 0
        %1804 = vmatpush1.bf16.msra.mxu0 0
        %1805 = vmatprep.subr.bf16.mxu0 0
        %1806 = vmatpush1.bf16.msra.mxu0 0
        %1807 = vmatprep.subr.bf16.mxu0 0
        %1808 = vmatpush1.bf16.msra.mxu0 0
        %1809 = vmatprep.subr.bf16.mxu0 0
        %1810 = vmatpush1.bf16.msra.mxu0 0
        %1811 = vmatprep.subr.bf16.mxu0 0
        %1812 = vmatpush1.bf16.msra.mxu0 0
        %1813 = vmatprep.subr.bf16.mxu0 0
        %1814 = vmatpush1.bf16.msra.mxu0 0
        %1815 = vmatprep.subr.bf16.mxu0 0
        %1816 = vmatpush1.bf16.msra.mxu0 0
        %1817 = vmatprep.mubr.bf16.mxu0 0
        %1818 = vmatmul.mubr.bf16.gmra.mrb[0].mxu0 %v1762
        %v1819 = vpop.f32.mrb[0].mxu0
        %v1820 = vadd.f32 0.0, %v1819
        %v1821 = vpop.f32.mrb[0].mxu0
        %v1822 = vpop.f32.mrb[0].mxu0
        %v1823 = vadd.f32 0.0, %v1822
        %v1824 = vpop.f32.mrb[0].mxu0
        %1825 = vmatprep.mubr.bf16.mxu0 0
        %1826 = vmatmul.mubr.bf16.gmra.mrb[0].mxu0 %v1765
        %v1827 = vpop.f32.mrb[0].mxu0
        %v1828 = vadd.f32 0.0, %v1827
        %v1829 = vpop.f32.mrb[0].mxu0
        %v1830 = vpop.f32.mrb[0].mxu0
        %v1831 = vadd.f32 0.0, %v1830
        %v1832 = vpop.f32.mrb[0].mxu0
        %1833 = vmatprep.mubr.bf16.mxu0 0
        %1834 = vmatmul.mubr.bf16.gmra.mrb[0].mxu0 %v1768
        %v1835 = vpop.f32.mrb[0].mxu0
        %v1836 = vadd.f32 0.0, %v1835
        %v1837 = vpop.f32.mrb[0].mxu0
        %v1838 = vpop.f32.mrb[0].mxu0
        %v1839 = vadd.f32 0.0, %v1838
        %v1840 = vpop.f32.mrb[0].mxu0
        %1841 = vmatprep.mubr.bf16.mxu0 0
        %1842 = vmatmul.mubr.bf16.gmra.mrb[0].mxu0 %v1771
        %v1843 = vpop.f32.mrb[0].mxu0
        %v1844 = vadd.f32 0.0, %v1843
        %v1845 = vpop.f32.mrb[0].mxu0
        %v1846 = vpop.f32.mrb[0].mxu0
        %v1847 = vadd.f32 0.0, %v1846
        %v1848 = vpop.f32.mrb[0].mxu0
        %1849 = vmatprep.mubr.bf16.mxu0 0
        %1850 = vmatmul.mubr.bf16.gmra.mrb[0].mxu0 %v1774
        %v1851 = vpop.f32.mrb[0].mxu0
        %v1852 = vadd.f32 0.0, %v1851
        %v1853 = vpop.f32.mrb[0].mxu0
        %v1854 = vpop.f32.mrb[0].mxu0
        %v1855 = vadd.f32 0.0, %v1854
        %v1856 = vpop.f32.mrb[0].mxu0
        %1857 = vmatprep.mubr.bf16.mxu0 0
        %1858 = vmatmul.mubr.bf16.gmra.mrb[0].mxu0 %v1777
        %v1859 = vpop.f32.mrb[0].mxu0
        %v1860 = vadd.f32 0.0, %v1859
        %v1861 = vpop.f32.mrb[0].mxu0
        %v1862 = vpop.f32.mrb[0].mxu0
        %v1863 = vadd.f32 0.0, %v1862
        %v1864 = vpop.f32.mrb[0].mxu0
        %1865 = vmatprep.mubr.bf16.mxu0 0
        %1866 = vmatmul.mubr.bf16.gmra.mrb[0].mxu0 %v1780
        %v1867 = vpop.f32.mrb[0].mxu0
        %v1868 = vadd.f32 0.0, %v1867
        %v1869 = vpop.f32.mrb[0].mxu0
        %v1870 = vpop.f32.mrb[0].mxu0
        %v1871 = vadd.f32 0.0, %v1870
        %v1872 = vpop.f32.mrb[0].mxu0
        %1873 = vmatprep.mubr.bf16.mxu0 0
        %1874 = vmatmul.mubr.bf16.gmra.mrb[0].mxu0 %v1783
        %v1875 = vpop.f32.mrb[0].mxu0
        %v1876 = vadd.f32 0.0, %v1875
        %v1877 = vpop.f32.mrb[0].mxu0
        %v1878 = vpop.f32.mrb[0].mxu0
        %v1879 = vadd.f32 0.0, %v1878
        %v1880 = vpop.f32.mrb[0].mxu0
        %1881 = vdwg.mxu0
        %v1882 = vpack.c.bf16 %v1823, %v1820
        %v1883 = vpack.c.bf16 %v1831, %v1828
        %v1884 = vpack.c.bf16 %v1839, %v1836
        %v1885 = vpack.c.bf16 %v1847, %v1844
        %v1886 = vpack.c.bf16 %v1855, %v1852
        %v1887 = vpack.c.bf16 %v1863, %v1860
        %v1888 = vpack.c.bf16 %v1871, %v1868
        %v1889 = vpack.c.bf16 %v1879, %v1876
        %v1890 = vtanh.bf16.pop %v1882
        %v1891 = vtanh.bf16.pop %v1883
        %v1892 = vtanh.bf16.pop %v1884
        %v1893 = vtanh.bf16.pop %v1885
        %v1894 = vtanh.bf16.pop %v1886
        %v1895 = vtanh.bf16.pop %v1887
        %v1896 = vtanh.bf16.pop %v1888
        %v1897 = vtanh.bf16.pop %v1889
        %v1898 = vld [vmem:[%s6] sm:$0xf]
        %v1899 = vld [vmem:[%s6 + $0x4] sm:$0xf]
        %v1900 = vld [vmem:[%s6 + $0x8] sm:$0xf]
        %v1901 = vld [vmem:[%s6 + $0xc] sm:$0xf]
        %v1902 = vlaneseq
        %v1903 = vshrl.u32 %v1902, 7
        %v1904 = vsub.s32 0, %v1903
        %v1905 = vrot.slane %v495, %v1904
        %v1910 = vunpack.c.l.b16 %v1898
        %v1911 = vunpack.c.l.b16 %v1899
        %v1912 = vunpack.c.l.b16 %v1900
        %v1913 = vunpack.c.l.b16 %v1901
        %v1914 = vpack.c.b16 %v1911, %v1910
        %v1915 = vpack.c.b16 %v1913, %v1912
        %v1919 = vsel %vm1176, %v1890, 0
        %v1922 = vsel %vm1176, %v1891, 0
        %v1925 = vsel %vm1176, %v1892, 0
        %v1928 = vsel %vm1176, %v1893, 0
        %v1931 = vsel %vm1176, %v1894, 0
        %v1934 = vsel %vm1176, %v1895, 0
        %v1937 = vsel %vm1176, %v1896, 0
        %v1940 = vsel %vm1176, %v1897, 0
        %1942 = vmatprep.subr.bf16.mxu0 0
        %1943 = vmatpush1.bf16.msra.mxu0 %v1914
        %1944 = vmatprep.subr.bf16.mxu0 0
        %1945 = vmatpush1.bf16.msra.mxu0 %v1915
        %1946 = vmatprep.subr.bf16.mxu0 0
        %1947 = vmatpush1.bf16.msra.mxu0 0
        %1948 = vmatprep.subr.bf16.mxu0 0
        %1949 = vmatpush1.bf16.msra.mxu0 0
        %1950 = vmatprep.subr.bf16.mxu0 0
        %1951 = vmatpush1.bf16.msra.mxu0 0
        %1952 = vmatprep.subr.bf16.mxu0 0
        %1953 = vmatpush1.bf16.msra.mxu0 0
        %1954 = vmatprep.subr.bf16.mxu0 0
        %1955 = vmatpush1.bf16.msra.mxu0 0
        %1956 = vmatprep.subr.bf16.mxu0 0
        %1957 = vmatpush1.bf16.msra.mxu0 0
        %1958 = vmatprep.subr.bf16.mxu0 0
        %1959 = vmatpush1.bf16.msra.mxu0 0
        %1960 = vmatprep.subr.bf16.mxu0 0
        %1961 = vmatpush1.bf16.msra.mxu0 0
        %1962 = vmatprep.subr.bf16.mxu0 0
        %1963 = vmatpush1.bf16.msra.mxu0 0
        %1964 = vmatprep.subr.bf16.mxu0 0
        %1965 = vmatpush1.bf16.msra.mxu0 0
        %1966 = vmatprep.subr.bf16.mxu0 0
        %1967 = vmatpush1.bf16.msra.mxu0 0
        %1968 = vmatprep.subr.bf16.mxu0 0
        %1969 = vmatpush1.bf16.msra.mxu0 0
        %1970 = vmatprep.subr.bf16.mxu0 0
        %1971 = vmatpush1.bf16.msra.mxu0 0
        %1972 = vmatprep.subr.bf16.mxu0 0
        %1973 = vmatpush1.bf16.msra.mxu0 0
        %1974 = vmatprep.mubr.bf16.mxu0 0
        %1975 = vmatmul.mubr.bf16.gmra.mrb[0].mxu0 %v1919
        %v1976 = vpop.f32.mrb[0].mxu0
        %v1977 = vadd.f32 %v1905, %v1976
        %v1978 = vpop.f32.mrb[0].mxu0
        %v1979 = vpop.f32.mrb[0].mxu0
        %v1980 = vadd.f32 %v1905, %v1979
        %v1981 = vpop.f32.mrb[0].mxu0
        %1982 = vmatprep.mubr.bf16.mxu0 0
        %1983 = vmatmul.mubr.bf16.gmra.mrb[0].mxu0 %v1922
        %v1984 = vpop.f32.mrb[0].mxu0
        %v1985 = vadd.f32 %v1905, %v1984
        %v1986 = vpop.f32.mrb[0].mxu0
        %v1987 = vpop.f32.mrb[0].mxu0
        %v1988 = vadd.f32 %v1905, %v1987
        %v1989 = vpop.f32.mrb[0].mxu0
        %1990 = vmatprep.mubr.bf16.mxu0 0
        %1991 = vmatmul.mubr.bf16.gmra.mrb[0].mxu0 %v1925
        %v1992 = vpop.f32.mrb[0].mxu0
        %v1993 = vadd.f32 %v1905, %v1992
        %v1994 = vpop.f32.mrb[0].mxu0
        %v1995 = vpop.f32.mrb[0].mxu0
        %v1996 = vadd.f32 %v1905, %v1995
        %v1997 = vpop.f32.mrb[0].mxu0
        %1998 = vmatprep.mubr.bf16.mxu0 0
        %1999 = vmatmul.mubr.bf16.gmra.mrb[0].mxu0 %v1928
        %v2000 = vpop.f32.mrb[0].mxu0
        %v2001 = vadd.f32 %v1905, %v2000
        %v2002 = vpop.f32.mrb[0].mxu0
        %v2003 = vpop.f32.mrb[0].mxu0
        %v2004 = vadd.f32 %v1905, %v2003
        %v2005 = vpop.f32.mrb[0].mxu0
        %2006 = vmatprep.mubr.bf16.mxu0 0
        %2007 = vmatmul.mubr.bf16.gmra.mrb[0].mxu0 %v1931
        %v2008 = vpop.f32.mrb[0].mxu0
        %v2009 = vadd.f32 %v1905, %v2008
        %v2010 = vpop.f32.mrb[0].mxu0
        %v2011 = vpop.f32.mrb[0].mxu0
        %v2012 = vadd.f32 %v1905, %v2011
        %v2013 = vpop.f32.mrb[0].mxu0
        %2014 = vmatprep.mubr.bf16.mxu0 0
        %2015 = vmatmul.mubr.bf16.gmra.mrb[0].mxu0 %v1934
        %v2016 = vpop.f32.mrb[0].mxu0
        %v2017 = vadd.f32 %v1905, %v2016
        %v2018 = vpop.f32.mrb[0].mxu0
        %v2019 = vpop.f32.mrb[0].mxu0
        %v2020 = vadd.f32 %v1905, %v2019
        %v2021 = vpop.f32.mrb[0].mxu0
        %2022 = vmatprep.mubr.bf16.mxu0 0
        %2023 = vmatmul.mubr.bf16.gmra.mrb[0].mxu0 %v1937
        %v2024 = vpop.f32.mrb[0].mxu0
        %v2025 = vadd.f32 %v1905, %v2024
        %v2026 = vpop.f32.mrb[0].mxu0
        %v2027 = vpop.f32.mrb[0].mxu0
        %v2028 = vadd.f32 %v1905, %v2027
        %v2029 = vpop.f32.mrb[0].mxu0
        %2030 = vmatprep.mubr.bf16.mxu0 0
        %2031 = vmatmul.mubr.bf16.gmra.mrb[0].mxu0 %v1940
        %v2032 = vpop.f32.mrb[0].mxu0
        %v2033 = vadd.f32 %v1905, %v2032
        %v2034 = vpop.f32.mrb[0].mxu0
        %v2035 = vpop.f32.mrb[0].mxu0
        %v2036 = vadd.f32 %v1905, %v2035
        %v2037 = vpop.f32.mrb[0].mxu0
        %2038 = vdwg.mxu0
        %v2039 = vadd.f32 %v1977, %v1980
        %v2040 = vadd.f32 %v2039, %v1985
        %v2041 = vadd.f32 %v2040, %v1988
        %v2042 = vadd.f32 %v2041, %v1993
        %v2043 = vadd.f32 %v2042, %v1996
        %v2044 = vadd.f32 %v2043, %v2001
        %v2045 = vadd.f32 %v2044, %v2004
        %v2046 = vadd.f32 %v2045, %v2009
        %v2047 = vadd.f32 %v2046, %v2012
        %v2048 = vadd.f32 %v2047, %v2017
        %v2049 = vadd.f32 %v2048, %v2020
        %v2050 = vadd.f32 %v2049, %v2025
        %v2051 = vadd.f32 %v2050, %v2028
        %v2052 = vadd.f32 %v2051, %v2033
        %v2053 = vadd.f32 %v2052, %v2036
        %v2054 = vrot.slane %v2053, 4
        %v2055 = vadd.f32 %v2053, %v2054
        %v2056 = vrot.slane %v2055, 2
        %v2057 = vadd.f32 %v2055, %v2056
        %v2058 = vrot.slane %v2057, 1
        %v2059 = vadd.f32 %v2057, %v2058
        %v2060 = vmul.f32 %v2059, %v1214
        %v2061 = vsub.f32 %v1977, %v2060
        %v2062 = vsub.f32 %v1980, %v2060
        %v2063 = vsub.f32 %v1985, %v2060
        %v2064 = vsub.f32 %v1988, %v2060
        %v2065 = vsub.f32 %v1993, %v2060
        %v2066 = vsub.f32 %v1996, %v2060
        %v2067 = vsub.f32 %v2001, %v2060
        %v2068 = vsub.f32 %v2004, %v2060
        %v2069 = vsub.f32 %v2009, %v2060
        %v2070 = vsub.f32 %v2012, %v2060
        %v2071 = vsub.f32 %v2017, %v2060
        %v2072 = vsub.f32 %v2020, %v2060
        %v2073 = vsub.f32 %v2025, %v2060
        %v2074 = vsub.f32 %v2028, %v2060
        %v2075 = vsub.f32 %v2033, %v2060
        %v2076 = vsub.f32 %v2036, %v2060
        %v2077 = vmul.f32 %v2061, %v2061
        %v2078 = vmul.f32 %v2062, %v2062
        %v2079 = vmul.f32 %v2063, %v2063
        %v2080 = vmul.f32 %v2064, %v2064
        %v2081 = vmul.f32 %v2065, %v2065
        %v2082 = vmul.f32 %v2066, %v2066
        %v2083 = vmul.f32 %v2067, %v2067
        %v2084 = vmul.f32 %v2068, %v2068
        %v2085 = vmul.f32 %v2069, %v2069
        %v2086 = vmul.f32 %v2070, %v2070
        %v2087 = vmul.f32 %v2071, %v2071
        %v2088 = vmul.f32 %v2072, %v2072
        %v2089 = vmul.f32 %v2073, %v2073
        %v2090 = vmul.f32 %v2074, %v2074
        %v2091 = vmul.f32 %v2075, %v2075
        %v2092 = vmul.f32 %v2076, %v2076
        %v2093 = vadd.f32 %v2077, %v2078
        %v2094 = vadd.f32 %v2093, %v2079
        %v2095 = vadd.f32 %v2094, %v2080
        %v2096 = vadd.f32 %v2095, %v2081
        %v2097 = vadd.f32 %v2096, %v2082
        %v2098 = vadd.f32 %v2097, %v2083
        %v2099 = vadd.f32 %v2098, %v2084
        %v2100 = vadd.f32 %v2099, %v2085
        %v2101 = vadd.f32 %v2100, %v2086
        %v2102 = vadd.f32 %v2101, %v2087
        %v2103 = vadd.f32 %v2102, %v2088
        %v2104 = vadd.f32 %v2103, %v2089
        %v2105 = vadd.f32 %v2104, %v2090
        %v2106 = vadd.f32 %v2105, %v2091
        %v2107 = vadd.f32 %v2106, %v2092
        %v2108 = vrot.slane %v2107, 4
        %v2109 = vadd.f32 %v2107, %v2108
        %v2110 = vrot.slane %v2109, 2
        %v2111 = vadd.f32 %v2109, %v2110
        %v2112 = vrot.slane %v2111, 1
        %v2113 = vadd.f32 %v2111, %v2112
        %v2114 = vmul.f32 %v2113, %v1214
        %v2115 = vadd.f32 %v2114, 1e-05
        %v2116 = vrsqrt.pop %v2115
        %v2117 = vmul.f32 %v2061, %v2116
        %v2118 = vmul.f32 %v2062, %v2116
        %v2119 = vmul.f32 %v2063, %v2116
        %v2120 = vmul.f32 %v2064, %v2116
        %v2121 = vmul.f32 %v2065, %v2116
        %v2122 = vmul.f32 %v2066, %v2116
        %v2123 = vmul.f32 %v2067, %v2116
        %v2124 = vmul.f32 %v2068, %v2116
        %v2125 = vmul.f32 %v2069, %v2116
        %v2126 = vmul.f32 %v2070, %v2116
        %v2127 = vmul.f32 %v2071, %v2116
        %v2128 = vmul.f32 %v2072, %v2116
        %v2129 = vmul.f32 %v2073, %v2116
        %v2130 = vmul.f32 %v2074, %v2116
        %v2131 = vmul.f32 %v2075, %v2116
        %v2132 = vmul.f32 %v2076, %v2116
        %v2133 = vlaneseq
        %v2134 = vshrl.u32 %v2133, 7
        %v2135 = vsub.s32 1, %v2134
        %v2136 = vrot.slane %v495, %v2135
        %v2137 = vmul.f32 %v2117, %v2136
        %v2138 = vmul.f32 %v2118, %v2136
        %v2139 = vmul.f32 %v2119, %v2136
        %v2140 = vmul.f32 %v2120, %v2136
        %v2141 = vmul.f32 %v2121, %v2136
        %v2142 = vmul.f32 %v2122, %v2136
        %v2143 = vmul.f32 %v2123, %v2136
        %v2144 = vmul.f32 %v2124, %v2136
        %v2145 = vmul.f32 %v2125, %v2136
        %v2146 = vmul.f32 %v2126, %v2136
        %v2147 = vmul.f32 %v2127, %v2136
        %v2148 = vmul.f32 %v2128, %v2136
        %v2149 = vmul.f32 %v2129, %v2136
        %v2150 = vmul.f32 %v2130, %v2136
        %v2151 = vmul.f32 %v2131, %v2136
        %v2152 = vmul.f32 %v2132, %v2136
        %v2153 = vlaneseq
        %v2154 = vshrl.u32 %v2153, 7
        %v2155 = vsub.s32 2, %v2154
        %v2156 = vrot.slane %v495, %v2155
        %v2157 = vadd.f32 %v2137, %v2156
        %v2158 = vadd.f32 %v2138, %v2156
        %v2159 = vadd.f32 %v2139, %v2156
        %v2160 = vadd.f32 %v2140, %v2156
        %v2161 = vadd.f32 %v2141, %v2156
        %v2162 = vadd.f32 %v2142, %v2156
        %v2163 = vadd.f32 %v2143, %v2156
        %v2164 = vadd.f32 %v2144, %v2156
        %v2165 = vadd.f32 %v2145, %v2156
        %v2166 = vadd.f32 %v2146, %v2156
        %v2167 = vadd.f32 %v2147, %v2156
        %v2168 = vadd.f32 %v2148, %v2156
        %v2169 = vadd.f32 %v2149, %v2156
        %v2170 = vadd.f32 %v2150, %v2156
        %v2171 = vadd.f32 %v2151, %v2156
        %v2172 = vadd.f32 %v2152, %v2156
        %2173 = vmax.xlane.f32.xlu0 %v2157
        %v2174 = vpop.xlane.xlu0 %2173
        %2175 = vmax.xlane.f32.xlu0 %v2158
        %v2176 = vpop.xlane.xlu0 %2175
        %2177 = vmax.xlane.f32.xlu0 %v2159
        %v2178 = vpop.xlane.xlu0 %2177
        %2179 = vmax.xlane.f32.xlu0 %v2160
        %v2180 = vpop.xlane.xlu0 %2179
        %2181 = vmax.xlane.f32.xlu0 %v2161
        %v2182 = vpop.xlane.xlu0 %2181
        %2183 = vmax.xlane.f32.xlu0 %v2162
        %v2184 = vpop.xlane.xlu0 %2183
        %2185 = vmax.xlane.f32.xlu0 %v2163
        %v2186 = vpop.xlane.xlu0 %2185
        %2187 = vmax.xlane.f32.xlu0 %v2164
        %v2188 = vpop.xlane.xlu0 %2187
        %2189 = vmax.xlane.f32.xlu0 %v2165
        %v2190 = vpop.xlane.xlu0 %2189
        %2191 = vmax.xlane.f32.xlu0 %v2166
        %v2192 = vpop.xlane.xlu0 %2191
        %2193 = vmax.xlane.f32.xlu0 %v2167
        %v2194 = vpop.xlane.xlu0 %2193
        %2195 = vmax.xlane.f32.xlu0 %v2168
        %v2196 = vpop.xlane.xlu0 %2195
        %2197 = vmax.xlane.f32.xlu0 %v2169
        %v2198 = vpop.xlane.xlu0 %2197
        %2199 = vmax.xlane.f32.xlu0 %v2170
        %v2200 = vpop.xlane.xlu0 %2199
        %2201 = vmax.xlane.f32.xlu0 %v2171
        %v2202 = vpop.xlane.xlu0 %2201
        %2203 = vmax.xlane.f32.xlu0 %v2172
        %v2204 = vpop.xlane.xlu0 %2203
        %v2205 = vsub.f32 %v2157, %v2174
        %v2206 = vsub.f32 %v2158, %v2176
        %v2207 = vsub.f32 %v2159, %v2178
        %v2208 = vsub.f32 %v2160, %v2180
        %v2209 = vsub.f32 %v2161, %v2182
        %v2210 = vsub.f32 %v2162, %v2184
        %v2211 = vsub.f32 %v2163, %v2186
        %v2212 = vsub.f32 %v2164, %v2188
        %v2213 = vsub.f32 %v2165, %v2190
        %v2214 = vsub.f32 %v2166, %v2192
        %v2215 = vsub.f32 %v2167, %v2194
        %v2216 = vsub.f32 %v2168, %v2196
        %v2217 = vsub.f32 %v2169, %v2198
        %v2218 = vsub.f32 %v2170, %v2200
        %v2219 = vsub.f32 %v2171, %v2202
        %v2220 = vsub.f32 %v2172, %v2204
        %v2221 = vpack.c.bf16 %v2206, %v2205
        %v2222 = vpack.c.bf16 %v2208, %v2207
        %v2223 = vpack.c.bf16 %v2210, %v2209
        %v2224 = vpack.c.bf16 %v2212, %v2211
        %v2225 = vpack.c.bf16 %v2214, %v2213
        %v2226 = vpack.c.bf16 %v2216, %v2215
        %v2227 = vpack.c.bf16 %v2218, %v2217
        %v2228 = vpack.c.bf16 %v2220, %v2219
        %v2230 = vmul.bf16 %v2221, 1069105081
        %v2231 = vpow.bf16.pop %v2230
        %v2233 = vmul.bf16 %v2222, 1069105081
        %v2234 = vpow.bf16.pop %v2233
        %v2236 = vmul.bf16 %v2223, 1069105081
        %v2237 = vpow.bf16.pop %v2236
        %v2239 = vmul.bf16 %v2224, 1069105081
        %v2240 = vpow.bf16.pop %v2239
        %v2242 = vmul.bf16 %v2225, 1069105081
        %v2243 = vpow.bf16.pop %v2242
        %v2245 = vmul.bf16 %v2226, 1069105081
        %v2246 = vpow.bf16.pop %v2245
        %v2248 = vmul.bf16 %v2227, 1069105081
        %v2249 = vpow.bf16.pop %v2248
        %v2251 = vmul.bf16 %v2228, 1069105081
        %v2252 = vpow.bf16.pop %v2251
        %v2253 = vunpack.c.l.bf16 %v2231
        %v2254 = vunpack.c.h.bf16 %v2231
        %v2255 = vunpack.c.l.bf16 %v2234
        %v2256 = vunpack.c.h.bf16 %v2234
        %v2257 = vunpack.c.l.bf16 %v2237
        %v2258 = vunpack.c.h.bf16 %v2237
        %v2259 = vunpack.c.l.bf16 %v2240
        %v2260 = vunpack.c.h.bf16 %v2240
        %v2261 = vunpack.c.l.bf16 %v2243
        %v2262 = vunpack.c.h.bf16 %v2243
        %v2263 = vunpack.c.l.bf16 %v2246
        %v2264 = vunpack.c.h.bf16 %v2246
        %v2265 = vunpack.c.l.bf16 %v2249
        %v2266 = vunpack.c.h.bf16 %v2249
        %v2267 = vunpack.c.l.bf16 %v2252
        %v2268 = vunpack.c.h.bf16 %v2252
        %2269 = vadd.xlane.f32.xlu0 %v2253
        %v2270 = vpop.xlane.xlu0 %2269
        %2271 = vadd.xlane.f32.xlu0 %v2254
        %v2272 = vpop.xlane.xlu0 %2271
        %2273 = vadd.xlane.f32.xlu0 %v2255
        %v2274 = vpop.xlane.xlu0 %2273
        %2275 = vadd.xlane.f32.xlu0 %v2256
        %v2276 = vpop.xlane.xlu0 %2275
        %2277 = vadd.xlane.f32.xlu0 %v2257
        %v2278 = vpop.xlane.xlu0 %2277
        %2279 = vadd.xlane.f32.xlu0 %v2258
        %v2280 = vpop.xlane.xlu0 %2279
        %2281 = vadd.xlane.f32.xlu0 %v2259
        %v2282 = vpop.xlane.xlu0 %2281
        %2283 = vadd.xlane.f32.xlu0 %v2260
        %v2284 = vpop.xlane.xlu0 %2283
        %2285 = vadd.xlane.f32.xlu0 %v2261
        %v2286 = vpop.xlane.xlu0 %2285
        %2287 = vadd.xlane.f32.xlu0 %v2262
        %v2288 = vpop.xlane.xlu0 %2287
        %2289 = vadd.xlane.f32.xlu0 %v2263
        %v2290 = vpop.xlane.xlu0 %2289
        %2291 = vadd.xlane.f32.xlu0 %v2264
        %v2292 = vpop.xlane.xlu0 %2291
        %2293 = vadd.xlane.f32.xlu0 %v2265
        %v2294 = vpop.xlane.xlu0 %2293
        %2295 = vadd.xlane.f32.xlu0 %v2266
        %v2296 = vpop.xlane.xlu0 %2295
        %2297 = vadd.xlane.f32.xlu0 %v2267
        %v2298 = vpop.xlane.xlu0 %2297
        %2299 = vadd.xlane.f32.xlu0 %v2268
        %v2300 = vpop.xlane.xlu0 %2299
        %v2301 = vrcp.pop %v2270
        %v2302 = vmul.f32 %v2253, %v2301
        %v2303 = vrcp.pop %v2272
        %v2304 = vmul.f32 %v2254, %v2303
        %v2305 = vrcp.pop %v2274
        %v2306 = vmul.f32 %v2255, %v2305
        %v2307 = vrcp.pop %v2276
        %v2308 = vmul.f32 %v2256, %v2307
        %v2309 = vrcp.pop %v2278
        %v2310 = vmul.f32 %v2257, %v2309
        %v2311 = vrcp.pop %v2280
        %v2312 = vmul.f32 %v2258, %v2311
        %v2313 = vrcp.pop %v2282
        %v2314 = vmul.f32 %v2259, %v2313
        %v2315 = vrcp.pop %v2284
        %v2316 = vmul.f32 %v2260, %v2315
        %v2317 = vrcp.pop %v2286
        %v2318 = vmul.f32 %v2261, %v2317
        %v2319 = vrcp.pop %v2288
        %v2320 = vmul.f32 %v2262, %v2319
        %v2321 = vrcp.pop %v2290
        %v2322 = vmul.f32 %v2263, %v2321
        %v2323 = vrcp.pop %v2292
        %v2324 = vmul.f32 %v2264, %v2323
        %v2325 = vrcp.pop %v2294
        %v2326 = vmul.f32 %v2265, %v2325
        %v2327 = vrcp.pop %v2296
        %v2328 = vmul.f32 %v2266, %v2327
        %v2329 = vrcp.pop %v2298
        %v2330 = vmul.f32 %v2267, %v2329
        %v2331 = vrcp.pop %v2300
        %v2332 = vmul.f32 %v2268, %v2331
        %2333 = vst [vmem:[%s424] sm:$0xff] %v2302
        %2334 = vst [vmem:[%s424 + $0x8] sm:$0xff] %v2304
        %2335 = vst [vmem:[%s424 + $0x10] sm:$0xff] %v2306
        %2336 = vst [vmem:[%s424 + $0x18] sm:$0xff] %v2308
        %2337 = vst [vmem:[%s424 + $0x20] sm:$0xff] %v2310
        %2338 = vst [vmem:[%s424 + $0x28] sm:$0xff] %v2312
        %2339 = vst [vmem:[%s424 + $0x30] sm:$0xff] %v2314
        %2340 = vst [vmem:[%s424 + $0x38] sm:$0xff] %v2316
        %2341 = vst [vmem:[%s424 + $0x40] sm:$0xff] %v2318
        %2342 = vst [vmem:[%s424 + $0x48] sm:$0xff] %v2320
        %2343 = vst [vmem:[%s424 + $0x50] sm:$0xff] %v2322
        %2344 = vst [vmem:[%s424 + $0x58] sm:$0xff] %v2324
        %2345 = vst [vmem:[%s424 + $0x60] sm:$0xff] %v2326
        %2346 = vst [vmem:[%s424 + $0x68] sm:$0xff] %v2328
        %2347 = vst [vmem:[%s424 + $0x70] sm:$0xff] %v2330
        %2348 = vst [vmem:[%s424 + $0x78] sm:$0xff] %v2332
        %v2349 = vunpack.c.l.bf16 %v1890
        %v2350 = vunpack.c.h.bf16 %v1890
        %v2351 = vunpack.c.l.bf16 %v1891
        %v2352 = vunpack.c.h.bf16 %v1891
        %v2353 = vunpack.c.l.bf16 %v1892
        %v2354 = vunpack.c.h.bf16 %v1892
        %v2355 = vunpack.c.l.bf16 %v1893
        %v2356 = vunpack.c.h.bf16 %v1893
        %v2357 = vunpack.c.l.bf16 %v1894
        %v2358 = vunpack.c.h.bf16 %v1894
        %v2359 = vunpack.c.l.bf16 %v1895
        %v2360 = vunpack.c.h.bf16 %v1895
        %v2361 = vunpack.c.l.bf16 %v1896
        %v2362 = vunpack.c.h.bf16 %v1896
        %v2363 = vunpack.c.l.bf16 %v1897
        %v2364 = vunpack.c.h.bf16 %v1897
        %2365 = vst.msk [vmem:[%s454] sm:$0xff] %vm1176, %v2349
        %2366 = vst.msk [vmem:[%s454 + $0x8] sm:$0xff] %vm1176, %v2350
        %2367 = vst.msk [vmem:[%s454 + $0x10] sm:$0xff] %vm1176, %v2351
        %2368 = vst.msk [vmem:[%s454 + $0x18] sm:$0xff] %vm1176, %v2352
        %2369 = vst.msk [vmem:[%s454 + $0x20] sm:$0xff] %vm1176, %v2353
        %2370 = vst.msk [vmem:[%s454 + $0x28] sm:$0xff] %vm1176, %v2354
        %2371 = vst.msk [vmem:[%s454 + $0x30] sm:$0xff] %vm1176, %v2355
        %2372 = vst.msk [vmem:[%s454 + $0x38] sm:$0xff] %vm1176, %v2356
        %2373 = vst.msk [vmem:[%s454 + $0x40] sm:$0xff] %vm1176, %v2357
        %2374 = vst.msk [vmem:[%s454 + $0x48] sm:$0xff] %vm1176, %v2358
        %2375 = vst.msk [vmem:[%s454 + $0x50] sm:$0xff] %vm1176, %v2359
        %2376 = vst.msk [vmem:[%s454 + $0x58] sm:$0xff] %vm1176, %v2360
        %2377 = vst.msk [vmem:[%s454 + $0x60] sm:$0xff] %vm1176, %v2361
        %2378 = vst.msk [vmem:[%s454 + $0x68] sm:$0xff] %vm1176, %v2362
        %2379 = vst.msk [vmem:[%s454 + $0x70] sm:$0xff] %vm1176, %v2363
        %2380 = vst.msk [vmem:[%s454 + $0x78] sm:$0xff] %vm1176, %v2364
        %v2381 = vlog2.pop %v2270
        %v2382 = vmul.f32 %v2381, 0.6931472
        %v2383 = vlog2.pop %v2272
        %v2384 = vmul.f32 %v2383, 0.6931472
        %v2385 = vlog2.pop %v2274
        %v2386 = vmul.f32 %v2385, 0.6931472
        %v2387 = vlog2.pop %v2276
        %v2388 = vmul.f32 %v2387, 0.6931472
        %v2389 = vlog2.pop %v2278
        %v2390 = vmul.f32 %v2389, 0.6931472
        %v2391 = vlog2.pop %v2280
        %v2392 = vmul.f32 %v2391, 0.6931472
        %v2393 = vlog2.pop %v2282
        %v2394 = vmul.f32 %v2393, 0.6931472
        %v2395 = vlog2.pop %v2284
        %v2396 = vmul.f32 %v2395, 0.6931472
        %v2397 = vlog2.pop %v2286
        %v2398 = vmul.f32 %v2397, 0.6931472
        %v2399 = vlog2.pop %v2288
        %v2400 = vmul.f32 %v2399, 0.6931472
        %v2401 = vlog2.pop %v2290
        %v2402 = vmul.f32 %v2401, 0.6931472
        %v2403 = vlog2.pop %v2292
        %v2404 = vmul.f32 %v2403, 0.6931472
        %v2405 = vlog2.pop %v2294
        %v2406 = vmul.f32 %v2405, 0.6931472
        %v2407 = vlog2.pop %v2296
        %v2408 = vmul.f32 %v2407, 0.6931472
        %v2409 = vlog2.pop %v2298
        %v2410 = vmul.f32 %v2409, 0.6931472
        %v2411 = vlog2.pop %v2300
        %v2412 = vmul.f32 %v2411, 0.6931472
        %v2413 = vsub.f32 %v2205, %v2382
        %v2414 = vsub.f32 %v2206, %v2384
        %v2415 = vsub.f32 %v2207, %v2386
        %v2416 = vsub.f32 %v2208, %v2388
        %v2417 = vsub.f32 %v2209, %v2390
        %v2418 = vsub.f32 %v2210, %v2392
        %v2419 = vsub.f32 %v2211, %v2394
        %v2420 = vsub.f32 %v2212, %v2396
        %v2421 = vsub.f32 %v2213, %v2398
        %v2422 = vsub.f32 %v2214, %v2400
        %v2423 = vsub.f32 %v2215, %v2402
        %v2424 = vsub.f32 %v2216, %v2404
        %v2425 = vsub.f32 %v2217, %v2406
        %v2426 = vsub.f32 %v2218, %v2408
        %v2427 = vsub.f32 %v2219, %v2410
        %v2428 = vsub.f32 %v2220, %v2412
        %v2429 = vmul.f32 %v461, %v2413
        %v2430 = vmul.f32 %v462, %v2414
        %v2431 = vmul.f32 %v463, %v2415
        %v2432 = vmul.f32 %v464, %v2416
        %v2433 = vmul.f32 %v465, %v2417
        %v2434 = vmul.f32 %v466, %v2418
        %v2435 = vmul.f32 %v467, %v2419
        %v2436 = vmul.f32 %v468, %v2420
        %v2437 = vmul.f32 %v469, %v2421
        %v2438 = vmul.f32 %v470, %v2422
        %v2439 = vmul.f32 %v471, %v2423
        %v2440 = vmul.f32 %v472, %v2424
        %v2441 = vmul.f32 %v473, %v2425
        %v2442 = vmul.f32 %v474, %v2426
        %v2443 = vmul.f32 %v475, %v2427
        %v2444 = vmul.f32 %v476, %v2428
        %2445 = vadd.xlane.f32.xlu0 %v2429
        %v2446 = vpop.xlane.xlu0 %2445
        %2447 = vadd.xlane.f32.xlu0 %v2430
        %v2448 = vpop.xlane.xlu0 %2447
        %2449 = vadd.xlane.f32.xlu0 %v2431
        %v2450 = vpop.xlane.xlu0 %2449
        %2451 = vadd.xlane.f32.xlu0 %v2432
        %v2452 = vpop.xlane.xlu0 %2451
        %2453 = vadd.xlane.f32.xlu0 %v2433
        %v2454 = vpop.xlane.xlu0 %2453
        %2455 = vadd.xlane.f32.xlu0 %v2434
        %v2456 = vpop.xlane.xlu0 %2455
        %2457 = vadd.xlane.f32.xlu0 %v2435
        %v2458 = vpop.xlane.xlu0 %2457
        %2459 = vadd.xlane.f32.xlu0 %v2436
        %v2460 = vpop.xlane.xlu0 %2459
        %2461 = vadd.xlane.f32.xlu0 %v2437
        %v2462 = vpop.xlane.xlu0 %2461
        %2463 = vadd.xlane.f32.xlu0 %v2438
        %v2464 = vpop.xlane.xlu0 %2463
        %2465 = vadd.xlane.f32.xlu0 %v2439
        %v2466 = vpop.xlane.xlu0 %2465
        %2467 = vadd.xlane.f32.xlu0 %v2440
        %v2468 = vpop.xlane.xlu0 %2467
        %2469 = vadd.xlane.f32.xlu0 %v2441
        %v2470 = vpop.xlane.xlu0 %2469
        %2471 = vadd.xlane.f32.xlu0 %v2442
        %v2472 = vpop.xlane.xlu0 %2471
        %2473 = vadd.xlane.f32.xlu0 %v2443
        %v2474 = vpop.xlane.xlu0 %2473
        %2475 = vadd.xlane.f32.xlu0 %v2444
        %v2476 = vpop.xlane.xlu0 %2475
        %v2477 = vsub.f32 0.0, %v2446
        %v2478 = vsub.f32 0.0, %v2448
        %v2479 = vsub.f32 0.0, %v2450
        %v2480 = vsub.f32 0.0, %v2452
        %v2481 = vsub.f32 0.0, %v2454
        %v2482 = vsub.f32 0.0, %v2456
        %v2483 = vsub.f32 0.0, %v2458
        %v2484 = vsub.f32 0.0, %v2460
        %v2485 = vsub.f32 0.0, %v2462
        %v2486 = vsub.f32 0.0, %v2464
        %v2487 = vsub.f32 0.0, %v2466
        %v2488 = vsub.f32 0.0, %v2468
        %v2489 = vsub.f32 0.0, %v2470
        %v2490 = vsub.f32 0.0, %v2472
        %v2491 = vsub.f32 0.0, %v2474
        %v2492 = vsub.f32 0.0, %v2476
        %v2493 = vmul.f32 %v1392, 1.0050251
        %v2494 = vmul.f32 %v1393, 1.0050251
        %v2495 = vmul.f32 %v1394, 1.0050251
        %v2496 = vmul.f32 %v1395, 1.0050251
        %v2497 = vmul.f32 %v1396, 1.0050251
        %v2498 = vmul.f32 %v1397, 1.0050251
        %v2499 = vmul.f32 %v1398, 1.0050251
        %v2500 = vmul.f32 %v1399, 1.0050251
        %v2501 = vmul.f32 %v1400, 1.0050251
        %v2502 = vmul.f32 %v1401, 1.0050251
        %v2503 = vmul.f32 %v1402, 1.0050251
        %v2504 = vmul.f32 %v1403, 1.0050251
        %v2505 = vmul.f32 %v1404, 1.0050251
        %v2506 = vmul.f32 %v1405, 1.0050251
        %v2507 = vmul.f32 %v1406, 1.0050251
        %v2508 = vmul.f32 %v1407, 1.0050251
        %v2509 = vmul.f32 %v1328, %v1328
        %v2510 = vmul.f32 %v1329, %v1329
        %v2511 = vmul.f32 %v1330, %v1330
        %v2512 = vmul.f32 %v1331, %v1331
        %v2513 = vmul.f32 %v1332, %v1332
        %v2514 = vmul.f32 %v1333, %v1333
        %v2515 = vmul.f32 %v1334, %v1334
        %v2516 = vmul.f32 %v1335, %v1335
        %v2517 = vmul.f32 %v1336, %v1336
        %v2518 = vmul.f32 %v1337, %v1337
        %v2519 = vmul.f32 %v1338, %v1338
        %v2520 = vmul.f32 %v1339, %v1339
        %v2521 = vmul.f32 %v1340, %v1340
        %v2522 = vmul.f32 %v1341, %v1341
        %v2523 = vmul.f32 %v1342, %v1342
        %v2524 = vmul.f32 %v1343, %v1343
        %v2525 = vmul.f32 %v2509, 1.0050251
        %v2526 = vmul.f32 %v2510, 1.0050251
        %v2527 = vmul.f32 %v2511, 1.0050251
        %v2528 = vmul.f32 %v2512, 1.0050251
        %v2529 = vmul.f32 %v2513, 1.0050251
        %v2530 = vmul.f32 %v2514, 1.0050251
        %v2531 = vmul.f32 %v2515, 1.0050251
        %v2532 = vmul.f32 %v2516, 1.0050251
        %v2533 = vmul.f32 %v2517, 1.0050251
        %v2534 = vmul.f32 %v2518, 1.0050251
        %v2535 = vmul.f32 %v2519, 1.0050251
        %v2536 = vmul.f32 %v2520, 1.0050251
        %v2537 = vmul.f32 %v2521, 1.0050251
        %v2538 = vmul.f32 %v2522, 1.0050251
        %v2539 = vmul.f32 %v2523, 1.0050251
        %v2540 = vmul.f32 %v2524, 1.0050251
        %v2541 = vsub.f32 -0.005012542, %v1328
        %v2542 = vsub.f32 -0.005012542, %v1329
        %v2543 = vsub.f32 -0.005012542, %v1330
        %v2544 = vsub.f32 -0.005012542, %v1331
        %v2545 = vsub.f32 -0.005012542, %v1332
        %v2546 = vsub.f32 -0.005012542, %v1333
        %v2547 = vsub.f32 -0.005012542, %v1334
        %v2548 = vsub.f32 -0.005012542, %v1335
        %v2549 = vsub.f32 -0.005012542, %v1336
        %v2550 = vsub.f32 -0.005012542, %v1337
        %v2551 = vsub.f32 -0.005012542, %v1338
        %v2552 = vsub.f32 -0.005012542, %v1339
        %v2553 = vsub.f32 -0.005012542, %v1340
        %v2554 = vsub.f32 -0.005012542, %v1341
        %v2555 = vsub.f32 -0.005012542, %v1342
        %v2556 = vsub.f32 -0.005012542, %v1343
        %2573 = vrot.lane.b32.xlu0 %v2525, 16
        %v2574 = vpop.permute.xlu0 %2573
        %2575 = vrot.lane.b32.xlu0 %v2526, 16
        %v2576 = vpop.permute.xlu0 %2575
        %2577 = vrot.lane.b32.xlu0 %v2527, 16
        %v2578 = vpop.permute.xlu0 %2577
        %2579 = vrot.lane.b32.xlu0 %v2528, 16
        %v2580 = vpop.permute.xlu0 %2579
        %2581 = vrot.lane.b32.xlu0 %v2529, 16
        %v2582 = vpop.permute.xlu0 %2581
        %2583 = vrot.lane.b32.xlu0 %v2530, 16
        %v2584 = vpop.permute.xlu0 %2583
        %2585 = vrot.lane.b32.xlu0 %v2531, 16
        %v2586 = vpop.permute.xlu0 %2585
        %2587 = vrot.lane.b32.xlu0 %v2532, 16
        %v2588 = vpop.permute.xlu0 %2587
        %2589 = vrot.lane.b32.xlu0 %v2533, 16
        %v2590 = vpop.permute.xlu0 %2589
        %2591 = vrot.lane.b32.xlu0 %v2534, 16
        %v2592 = vpop.permute.xlu0 %2591
        %2593 = vrot.lane.b32.xlu0 %v2535, 16
        %v2594 = vpop.permute.xlu0 %2593
        %2595 = vrot.lane.b32.xlu0 %v2536, 16
        %v2596 = vpop.permute.xlu0 %2595
        %2597 = vrot.lane.b32.xlu0 %v2537, 16
        %v2598 = vpop.permute.xlu0 %2597
        %2599 = vrot.lane.b32.xlu0 %v2538, 16
        %v2600 = vpop.permute.xlu0 %2599
        %2601 = vrot.lane.b32.xlu0 %v2539, 16
        %v2602 = vpop.permute.xlu0 %2601
        %2603 = vrot.lane.b32.xlu0 %v2540, 16
        %v2604 = vpop.permute.xlu0 %2603
        %v2621 = vadd.f32 %v2493, %v2574
        %v2622 = vadd.f32 %v2494, %v2576
        %v2623 = vadd.f32 %v2495, %v2578
        %v2624 = vadd.f32 %v2496, %v2580
        %v2625 = vadd.f32 %v2497, %v2582
        %v2626 = vadd.f32 %v2498, %v2584
        %v2627 = vadd.f32 %v2499, %v2586
        %v2628 = vadd.f32 %v2500, %v2588
        %v2629 = vadd.f32 %v2501, %v2590
        %v2630 = vadd.f32 %v2502, %v2592
        %v2631 = vadd.f32 %v2503, %v2594
        %v2632 = vadd.f32 %v2504, %v2596
        %v2633 = vadd.f32 %v2505, %v2598
        %v2634 = vadd.f32 %v2506, %v2600
        %v2635 = vadd.f32 %v2507, %v2602
        %v2636 = vadd.f32 %v2508, %v2604
        %v2637 = vadd.f32 %v2621, %v2541
        %v2638 = vadd.f32 %v2622, %v2542
        %v2639 = vadd.f32 %v2623, %v2543
        %v2640 = vadd.f32 %v2624, %v2544
        %v2641 = vadd.f32 %v2625, %v2545
        %v2642 = vadd.f32 %v2626, %v2546
        %v2643 = vadd.f32 %v2627, %v2547
        %v2644 = vadd.f32 %v2628, %v2548
        %v2645 = vadd.f32 %v2629, %v2549
        %v2646 = vadd.f32 %v2630, %v2550
        %v2647 = vadd.f32 %v2631, %v2551
        %v2648 = vadd.f32 %v2632, %v2552
        %v2649 = vadd.f32 %v2633, %v2553
        %v2650 = vadd.f32 %v2634, %v2554
        %v2651 = vadd.f32 %v2635, %v2555
        %v2652 = vadd.f32 %v2636, %v2556
        %2669 = vrot.lane.b32.xlu0 %v2637, 112
        %v2670 = vpop.permute.xlu0 %2669
        %2671 = vrot.lane.b32.xlu0 %v2638, 112
        %v2672 = vpop.permute.xlu0 %2671
        %2673 = vrot.lane.b32.xlu0 %v2639, 112
        %v2674 = vpop.permute.xlu0 %2673
        %2675 = vrot.lane.b32.xlu0 %v2640, 112
        %v2676 = vpop.permute.xlu0 %2675
        %2677 = vrot.lane.b32.xlu0 %v2641, 112
        %v2678 = vpop.permute.xlu0 %2677
        %2679 = vrot.lane.b32.xlu0 %v2642, 112
        %v2680 = vpop.permute.xlu0 %2679
        %2681 = vrot.lane.b32.xlu0 %v2643, 112
        %v2682 = vpop.permute.xlu0 %2681
        %2683 = vrot.lane.b32.xlu0 %v2644, 112
        %v2684 = vpop.permute.xlu0 %2683
        %2685 = vrot.lane.b32.xlu0 %v2645, 112
        %v2686 = vpop.permute.xlu0 %2685
        %2687 = vrot.lane.b32.xlu0 %v2646, 112
        %v2688 = vpop.permute.xlu0 %2687
        %2689 = vrot.lane.b32.xlu0 %v2647, 112
        %v2690 = vpop.permute.xlu0 %2689
        %2691 = vrot.lane.b32.xlu0 %v2648, 112
        %v2692 = vpop.permute.xlu0 %2691
        %2693 = vrot.lane.b32.xlu0 %v2649, 112
        %v2694 = vpop.permute.xlu0 %2693
        %2695 = vrot.lane.b32.xlu0 %v2650, 112
        %v2696 = vpop.permute.xlu0 %2695
        %2697 = vrot.lane.b32.xlu0 %v2651, 112
        %v2698 = vpop.permute.xlu0 %2697
        %2699 = vrot.lane.b32.xlu0 %v2652, 112
        %v2700 = vpop.permute.xlu0 %2699
        %v2717 = vsel %vm1568, %v2670, 0.0
        %2718 = vadd.xlane.f32.xlu0 %v2717
        %v2719 = vpop.xlane.xlu0 %2718
        %v2720 = vsel %vm1568, %v2672, 0.0
        %2721 = vadd.xlane.f32.xlu0 %v2720
        %v2722 = vpop.xlane.xlu0 %2721
        %v2723 = vsel %vm1568, %v2674, 0.0
        %2724 = vadd.xlane.f32.xlu0 %v2723
        %v2725 = vpop.xlane.xlu0 %2724
        %v2726 = vsel %vm1568, %v2676, 0.0
        %2727 = vadd.xlane.f32.xlu0 %v2726
        %v2728 = vpop.xlane.xlu0 %2727
        %v2729 = vsel %vm1568, %v2678, 0.0
        %2730 = vadd.xlane.f32.xlu0 %v2729
        %v2731 = vpop.xlane.xlu0 %2730
        %v2732 = vsel %vm1568, %v2680, 0.0
        %2733 = vadd.xlane.f32.xlu0 %v2732
        %v2734 = vpop.xlane.xlu0 %2733
        %v2735 = vsel %vm1568, %v2682, 0.0
        %2736 = vadd.xlane.f32.xlu0 %v2735
        %v2737 = vpop.xlane.xlu0 %2736
        %v2738 = vsel %vm1568, %v2684, 0.0
        %2739 = vadd.xlane.f32.xlu0 %v2738
        %v2740 = vpop.xlane.xlu0 %2739
        %v2741 = vsel %vm1568, %v2686, 0.0
        %2742 = vadd.xlane.f32.xlu0 %v2741
        %v2743 = vpop.xlane.xlu0 %2742
        %v2744 = vsel %vm1568, %v2688, 0.0
        %2745 = vadd.xlane.f32.xlu0 %v2744
        %v2746 = vpop.xlane.xlu0 %2745
        %v2747 = vsel %vm1568, %v2690, 0.0
        %2748 = vadd.xlane.f32.xlu0 %v2747
        %v2749 = vpop.xlane.xlu0 %2748
        %v2750 = vsel %vm1568, %v2692, 0.0
        %2751 = vadd.xlane.f32.xlu0 %v2750
        %v2752 = vpop.xlane.xlu0 %2751
        %v2753 = vsel %vm1568, %v2694, 0.0
        %2754 = vadd.xlane.f32.xlu0 %v2753
        %v2755 = vpop.xlane.xlu0 %2754
        %v2756 = vsel %vm1568, %v2696, 0.0
        %2757 = vadd.xlane.f32.xlu0 %v2756
        %v2758 = vpop.xlane.xlu0 %2757
        %v2759 = vsel %vm1568, %v2698, 0.0
        %2760 = vadd.xlane.f32.xlu0 %v2759
        %v2761 = vpop.xlane.xlu0 %2760
        %v2762 = vsel %vm1568, %v2700, 0.0
        %2763 = vadd.xlane.f32.xlu0 %v2762
        %v2764 = vpop.xlane.xlu0 %2763
        %v2765 = vsub.f32 %v2719, 16.0
        %v2766 = vsub.f32 %v2722, 16.0
        %v2767 = vsub.f32 %v2725, 16.0
        %v2768 = vsub.f32 %v2728, 16.0
        %v2769 = vsub.f32 %v2731, 16.0
        %v2770 = vsub.f32 %v2734, 16.0
        %v2771 = vsub.f32 %v2737, 16.0
        %v2772 = vsub.f32 %v2740, 16.0
        %v2773 = vsub.f32 %v2743, 16.0
        %v2774 = vsub.f32 %v2746, 16.0
        %v2775 = vsub.f32 %v2749, 16.0
        %v2776 = vsub.f32 %v2752, 16.0
        %v2777 = vsub.f32 %v2755, 16.0
        %v2778 = vsub.f32 %v2758, 16.0
        %v2779 = vsub.f32 %v2761, 16.0
        %v2780 = vsub.f32 %v2764, 16.0
        %v2781 = vmul.f32 %v2765, 0.5
        %v2782 = vmul.f32 %v2766, 0.5
        %v2783 = vmul.f32 %v2767, 0.5
        %v2784 = vmul.f32 %v2768, 0.5
        %v2785 = vmul.f32 %v2769, 0.5
        %v2786 = vmul.f32 %v2770, 0.5
        %v2787 = vmul.f32 %v2771, 0.5
        %v2788 = vmul.f32 %v2772, 0.5
        %v2789 = vmul.f32 %v2773, 0.5
        %v2790 = vmul.f32 %v2774, 0.5
        %v2791 = vmul.f32 %v2775, 0.5
        %v2792 = vmul.f32 %v2776, 0.5
        %v2793 = vmul.f32 %v2777, 0.5
        %v2794 = vmul.f32 %v2778, 0.5
        %v2795 = vmul.f32 %v2779, 0.5
        %v2796 = vmul.f32 %v2780, 0.5
        %v2797 = vadd.f32 %v2477, %v2781
        %v2798 = vadd.f32 %v2478, %v2782
        %v2799 = vadd.f32 %v2479, %v2783
        %v2800 = vadd.f32 %v2480, %v2784
        %v2801 = vadd.f32 %v2481, %v2785
        %v2802 = vadd.f32 %v2482, %v2786
        %v2803 = vadd.f32 %v2483, %v2787
        %v2804 = vadd.f32 %v2484, %v2788
        %v2805 = vadd.f32 %v2485, %v2789
        %v2806 = vadd.f32 %v2486, %v2790
        %v2807 = vadd.f32 %v2487, %v2791
        %v2808 = vadd.f32 %v2488, %v2792
        %v2809 = vadd.f32 %v2489, %v2793
        %v2810 = vadd.f32 %v2490, %v2794
        %v2811 = vadd.f32 %v2491, %v2795
        %v2812 = vadd.f32 %v2492, %v2796
        %v2813 = vadd.f32 %v2797, %v2798
        %v2814 = vadd.f32 %v2813, %v2799
        %v2815 = vadd.f32 %v2814, %v2800
        %v2816 = vadd.f32 %v2815, %v2801
        %v2817 = vadd.f32 %v2816, %v2802
        %v2818 = vadd.f32 %v2817, %v2803
        %v2819 = vadd.f32 %v2818, %v2804
        %v2820 = vadd.f32 %v2819, %v2805
        %v2821 = vadd.f32 %v2820, %v2806
        %v2822 = vadd.f32 %v2821, %v2807
        %v2823 = vadd.f32 %v2822, %v2808
        %v2824 = vadd.f32 %v2823, %v2809
        %v2825 = vadd.f32 %v2824, %v2810
        %v2826 = vadd.f32 %v2825, %v2811
        %v2827 = vadd.f32 %v2826, %v2812
        %v2828 = vrot.slane %v2827, 4
        %v2829 = vadd.f32 %v2827, %v2828
        %v2830 = vrot.slane %v2829, 2
        %v2831 = vadd.f32 %v2829, %v2830
        %v2832 = vrot.slane %v2831, 1
        %v2833 = vadd.f32 %v2831, %v2832
        %v2834 = vmul.f32 %v2833, 0.0078125
        %vm2835 = vcmask 0
        %2836 = vst.msk [vmem:[%s458] sm:$0x1] %vm2835, %v2834
        %s2837 = sand.u32 %s255, 1
        %s2838 = scalar_lea.sflag [#allocation3], %s2837
        %s2839 = sand.u32 %s255, 1
        %s2840 = smul.addr %s2839, 128
        %s2841 = scalar_lea.vmem [#allocation2], %s2840
        %s2842 = smul.u32 16, %s27
        %p2843 = scmp.lt.s32.totalorder %s2842, 63
        %s2844 = scalar_select %p2843, %s2842, 63
        %s2845 = smul.addr %s2844, 8
        %s2846 = scalar_lea.vmem %s11, %s2845
        %p2847 = scmp.lt.s32.totalorder %s27, 3
        %s2848 = scalar_select %p2847, %s27, 3
        %s2849 = scalar_lea.vmem %s12, %s2848
        // Predicated region
        $region61: #{ntm_forward.1} parent=59 // pred_check
          %p2850 = pneg %p265
        $region62: #{ntm_forward.1} parent=59 // pred_check_branch
          %2852 = sbr.rel (%p2850) target = $region64
        $region63: #{ntm_forward.1} parent=59 // pred_region
          %s2853 = smul.u32 16, %s27
          %s2855 = ssub.s32 2048, 2048
          %2856 = vsyncadd %s2838, %s2855
          %s2857 = smul.addr %s2853, 128
          %s2858 = scalar_lea.hbm %s10, %s2857
          %s2859 = sshll.u32 %s2841, 4
          %s2860 = int_to_ptr.vmem [resolvable:$true] %s2859
          %2865 = dma.vmem_to_hbm [thread:$0]  %s2860, 2048, %s2858, %s2838, 128, 128, 8
        $region64: #{ntm_forward.1} parent=59 // pred_fallthru
          _
        // Predicated region
        $region65: #{ntm_forward.1} parent=59 // pred_check
          %p2866 = pneg %p291
        $region66: #{ntm_forward.1} parent=59 // pred_check_branch
          %2868 = sbr.rel (%p2866) target = $region68
        $region67: #{ntm_forward.1} parent=59 // pred_region
          %s2869 = smul.u32 16, %s27
        $region68: #{ntm_forward.1} parent=59 // pred_fallthru
          _
        // Predicated region
        $region69: #{ntm_forward.1} parent=59 // pred_check
          %p2870 = pneg %p317
        $region70: #{ntm_forward.1} parent=59 // pred_check_branch
          %2872 = sbr.rel (%p2870) target = $region72
        $region71: #{ntm_forward.1} parent=59 // pred_region
          _
        $region72: #{ntm_forward.1} parent=59 // pred_fallthru
          _
      $region60: #{ntm_forward.1} parent=5 // pred_fallthru
        _
      %p2873 = scmp.le.s32.totalorder 2, %s22
      // Predicated region
      $region73: #{ntm_forward.1} parent=5 // pred_check
        %p2874 = pneg %p2873
      $region74: #{ntm_forward.1} parent=5 // pred_check_branch
        %2876 = sbr.rel (%p2874) target = $region76
      $region75: #{ntm_forward.1} parent=5 // pred_region
        %s2877 = ssub.s32 %s22, 2
        // Predicated region
        $region77: #{ntm_forward.1} parent=75 // pred_check
          %p2878 = pneg %p271
        $region78: #{ntm_forward.1} parent=75 // pred_check_branch
          %2880 = sbr.rel (%p2878) target = $region80
        $region79: #{ntm_forward.1} parent=75 // pred_region
          %s2881 = sand.u32 %s256, 1
          %s2882 = scalar_lea.sflag [#allocation3], %s2881
          %s2883 = sand.u32 %s256, 1
          %s2884 = smul.addr %s2883, 128
          %s2885 = scalar_lea.vmem [#allocation2], %s2884
          %2886 = dma.done %s2882, 2048
        $region80: #{ntm_forward.1} parent=75 // pred_fallthru
          _
        // Predicated region
        $region81: #{ntm_forward.1} parent=75 // pred_check
          %p2887 = pneg %p297
        $region82: #{ntm_forward.1} parent=75 // pred_check_branch
          %2889 = sbr.rel (%p2887) target = $region84
        $region83: #{ntm_forward.1} parent=75 // pred_region
          %s2890 = smul.u32 16, %s28
          %p2891 = scmp.lt.s32.totalorder %s2890, 63
          %s2892 = scalar_select %p2891, %s2890, 63
          %s2893 = smul.addr %s2892, 8
          %s2894 = scalar_lea.vmem %s11, %s2893
        $region84: #{ntm_forward.1} parent=75 // pred_fallthru
          _
        // Predicated region
        $region85: #{ntm_forward.1} parent=75 // pred_check
          %p2895 = pneg %p323
        $region86: #{ntm_forward.1} parent=75 // pred_check_branch
          %2897 = sbr.rel (%p2895) target = $region88
        $region87: #{ntm_forward.1} parent=75 // pred_region
          %p2898 = scmp.lt.s32.totalorder %s28, 3
          %s2899 = scalar_select %p2898, %s28, 3
          %s2900 = scalar_lea.vmem %s12, %s2899
        $region88: #{ntm_forward.1} parent=75 // pred_fallthru
          _
      $region76: #{ntm_forward.1} parent=5 // pred_fallthru
        _
    $region6: #{ntm_forward.1} parent=1 // loop_footer
      %s26 = sadd.s32 1, %s22
    $region7: #{ntm_forward.1} parent=1 // loop_footer_branch
      %21 = sbr.rel target = $region3
    $region8: #{ntm_forward.1} parent=1 // loop_exit
      _
    %2901 = vsyncpa [#allocation3], 1
    %s2902 = scalar_lea.sflag [#allocation3], 1
    %2903 = vsyncpa %s2902, 1

</llo_original>
